<compile_context>
chip_gen: v5e
topology: v5e:2x2
jax: 0.10.0
libtpu: 0.0.40
codegen_flags: <defaults>
</compile_context>

<pallas_src>
import jax
import jax.numpy as jnp
from jax.experimental import pallas as pl
from jax.experimental.pallas import tpu as pltpu


def se_gate_conv1x1_kernel(gate_ref, w_ref, x_ref, o_ref):
    # gate_ref: (1, C_in) f32 | w_ref: (C_out, C_in) bf16 | x_ref: (C_in, HW) f32/bf16
    g = jax.nn.sigmoid(gate_ref[...])                    # EUP, (1, C_in) f32
    # bf16 * f32 promotes to f32 -> gate applied at full precision, then one
    # cast down to bf16 on the *small* operand for the MXU.
    w_gated = (w_ref[...] * g).astype(jnp.bfloat16)      # VPU, (C_out, C_in)
    x = x_ref[...]
    if x.dtype != jnp.bfloat16:                          # static dtype check (trace time)
        x = x.astype(jnp.bfloat16)
    acc = jnp.dot(w_gated, x, preferred_element_type=jnp.float32)  # MXU, f32 accumulate
    o_ref[...] = acc.astype(o_ref.dtype)


def se_gate_conv1x1(x_nchw, gate_nchw, w_oihw, *, out_dtype=jnp.float32):
    """Conv1x1(sigmoid(gate) * x), no bias.

    x NCHW (f32 or bf16), gate (1, C, 1, 1) f32, w OIHW (ideally pre-converted
    to bf16 once at parameter-prep time).
    """
    N, C_in, H, W = x_nchw.shape
    C_out = w_oihw.shape[0]
    assert N == 1, "kernel written for batch 1 (as in the reference module)"
    HW = H * W

    # Pure reshapes of contiguous buffers -> no data movement.
    x2d = x_nchw.reshape(C_in, HW)          # (960, 196)
    gate2d = gate_nchw.reshape(1, C_in)     # (1, 960)
    w2d = w_oihw.reshape(C_out, C_in)       # (160, 960), bf16 if pre-converted

    cost = pl.CostEstimate(
        flops=2 * HW * C_in * C_out,
        transcendentals=C_in,
        bytes_accessed=(x2d.dtype.itemsize * C_in * HW
                        + w2d.dtype.itemsize * C_out * C_in
                        + gate2d.dtype.itemsize * C_in
                        + jnp.dtype(out_dtype).itemsize * C_out * HW),
    )

    out2d = pl.pallas_call(
        se_gate_conv1x1_kernel,
        out_shape=jax.ShapeDtypeStruct((C_out, HW), out_dtype),
        grid=(1,),                                          # single-shot, all generations
        in_specs=[
            pl.BlockSpec((1, C_in), lambda i: (0, 0)),      # gate
            pl.BlockSpec((C_out, C_in), lambda i: (0, 0)),  # full (bf16) weight slab
            pl.BlockSpec((C_in, HW), lambda i: (0, 0)),     # full activation
        ],
        out_specs=pl.BlockSpec((C_out, HW), lambda i: (0, 0)),
        compiler_params=pltpu.CompilerParams(
            dimension_semantics=("arbitrary",)),
        cost_estimate=cost,
    )(gate2d, w2d, x2d)

    return out2d.reshape(1, C_out, H, W)


if __name__ == "__main__":
    key = jax.random.PRNGKey(0)
    k1, k2, k3 = jax.random.split(key, 3)

    # Shapes implied by the module's forward pass.
    C_in, C_out, H, W = 960, 160, 14, 14
    x329 = jax.random.normal(k1, (1, C_in, H, W), dtype=jnp.float32)   # main input
    x333 = jax.random.normal(k2, (1, C_in, 1, 1), dtype=jnp.float32)   # SE gate

    # Deterministic Conv2d(960, 160, 1, bias=False) weight (OIHW), kaiming-ish
    # scale.  Converted to bf16 ONCE here ("parameter-prep time"), per review —
    # never a per-call astype in the wrapper.
    w_f32 = jax.random.normal(k3, (C_out, C_in, 1, 1), dtype=jnp.float32) * (1.0 / C_in) ** 0.5
    w = w_f32.astype(jnp.bfloat16)

    out = se_gate_conv1x1(x329, x333, w)
    out = jax.block_until_ready(out)
    assert out.shape == (1, C_out, H, W)
    assert out.dtype == jnp.float32

    # Reference in plain JAX using the same (bf16) parameter upcast to f32.
    # Tolerance covers the in-kernel bf16 MXU operands (intentional tradeoff).
    gated = jax.nn.sigmoid(x333) * x329                       # (1, C_in, H, W) f32
    ref = jnp.einsum("nchw,oc->nohw", gated,
                     w.astype(jnp.float32).reshape(C_out, C_in))
    assert jnp.allclose(out, ref, atol=2e-2, rtol=2e-2), (
        float(jnp.max(jnp.abs(out - ref))))

    print("KERNEL_OK")
</pallas_src>

<mosaic_0001>
module attributes {stable_mosaic.version = 11 : i64} {
  func.func @se_gate_conv1x1_kernel(%arg0: i32, %arg1: memref<1x960xf32, #tpu.memory_space<vmem>>, %arg2: memref<160x960xbf16, #tpu.memory_space<vmem>>, %arg3: memref<960x196xf32, #tpu.memory_space<vmem>>, %arg4: memref<160x196xf32, #tpu.memory_space<vmem>>) attributes {dimension_semantics = [#tpu.dimension_semantics<arbitrary>], iteration_bounds = array<i64: 1>, scalar_prefetch = 0 : i64, scratch_operands = 0 : i64, tpu.core_type = #tpu.core_type<tc>, window_params = [{pipeline_mode = #tpu.pipeline_mode<synchronous>, transform_indices = @transform_0, window_bounds = array<i64: 1, 960>}, {pipeline_mode = #tpu.pipeline_mode<synchronous>, transform_indices = @transform_1, window_bounds = array<i64: 160, 960>}, {pipeline_mode = #tpu.pipeline_mode<synchronous>, transform_indices = @transform_2, window_bounds = array<i64: 960, 196>}, {pipeline_mode = #tpu.pipeline_mode<synchronous>, transform_indices = @transform_3, window_bounds = array<i64: 160, 196>}]} {
    %c0 = arith.constant 0 : index
    %c0_0 = arith.constant 0 : index
    %0 = vector.load %arg1[%c0, %c0_0] : memref<1x960xf32, #tpu.memory_space<vmem>>, vector<1x960xf32>
    %1 = arith.negf %0 : vector<1x960xf32>
    %2 = math.exp %1 : vector<1x960xf32>
    %cst = arith.constant 1.000000e+00 : f32
    %3 = vector.broadcast %cst : f32 to vector<1x960xf32>
    %4 = arith.addf %3, %2 : vector<1x960xf32>
    %5 = arith.divf %3, %4 : vector<1x960xf32>
    %c0_1 = arith.constant 0 : index
    %c0_2 = arith.constant 0 : index
    %6 = vector.load %arg2[%c0_1, %c0_2] : memref<160x960xbf16, #tpu.memory_space<vmem>>, vector<160x960xbf16>
    %7 = arith.extf %6 : vector<160x960xbf16> to vector<160x960xf32>
    %8 = vector.broadcast %5 : vector<1x960xf32> to vector<160x960xf32>
    %9 = arith.mulf %7, %8 : vector<160x960xf32>
    %10 = arith.truncf %9 : vector<160x960xf32> to vector<160x960xbf16>
    %c0_3 = arith.constant 0 : index
    %c0_4 = arith.constant 0 : index
    %11 = vector.load %arg3[%c0_3, %c0_4] : memref<960x196xf32, #tpu.memory_space<vmem>>, vector<960x196xf32>
    %12 = arith.truncf %11 : vector<960x196xf32> to vector<960x196xbf16>
    %cst_5 = arith.constant dense<0.000000e+00> : vector<160x196xf32>
    %13 = tpu.matmul %10, %12, %cst_5 {dimension_numbers = #tpu.dot_dimension_numbers<[1], [0], [0], [1], [0, 0, 1, 1], [], []>} : vector<160x960xbf16>, vector<960x196xbf16>, vector<160x196xf32> -> vector<160x196xf32>
    %c0_6 = arith.constant 0 : index
    %c0_7 = arith.constant 0 : index
    %14 = vector.load %arg4[%c0_6, %c0_7] : memref<160x196xf32, #tpu.memory_space<vmem>>, vector<160x196xf32>
    tpu.vector_store %arg4[%c0_6, %c0_7], %13 {strides = array<i32>} : memref<160x196xf32, #tpu.memory_space<vmem>>, vector<160x196xf32>,
    return
  }
  func.func @transform_0(%arg0: i32) -> (i32, i32) {
    %c0_i32 = arith.constant 0 : i32
    %c0_i32_0 = arith.constant 0 : i32
    %c0_i32_1 = arith.constant 0 : i32
    return %c0_i32, %c0_i32_0 : i32, i32
  }
  func.func @transform_1(%arg0: i32) -> (i32, i32) {
    %c0_i32 = arith.constant 0 : i32
    %c0_i32_0 = arith.constant 0 : i32
    %c0_i32_1 = arith.constant 0 : i32
    return %c0_i32, %c0_i32_0 : i32, i32
  }
  func.func @transform_2(%arg0: i32) -> (i32, i32) {
    %c0_i32 = arith.constant 0 : i32
    %c0_i32_0 = arith.constant 0 : i32
    %c0_i32_1 = arith.constant 0 : i32
    return %c0_i32, %c0_i32_0 : i32, i32
  }
  func.func @transform_3(%arg0: i32) -> (i32, i32) {
    %c0_i32 = arith.constant 0 : i32
    %c0_i32_0 = arith.constant 0 : i32
    %c0_i32_1 = arith.constant 0 : i32
    return %c0_i32, %c0_i32_0 : i32, i32
  }
}

</mosaic_0001>

<llo_original>
// kernel: tpu_custom_call.1
$region0: #{tpu_custom_call.1}
  #allocation0 [shape = 'u32[]', space=smem, size = 0x4, offset = 0x4, fixed_abs, tag = 'smem constant byte address 0x4 - core index']
  #allocation1 [shape = 'u32[72,128]{1,0:T(1,128)}', space=vmem, size = 0x9000, scoped, tag = 'internal scratch']
  %s0 = inlined_call_operand.vmem [shape: f32[1,960], index: 0, kind: input, shape index: {}]
  %s1 = inlined_call_operand.vmem [shape: bf16[160,960], index: 1, kind: input, shape index: {}]
  %s2 = inlined_call_operand.vmem [shape: f32[960,196], index: 2, kind: input, shape index: {}]
  %s3 = inlined_call_operand.hbm [shape: f32[160,196], index: 3, kind: output, shape index: {}]
  %s4 = sld [smem:[#allocation0]]
  $region22: #{tpu_custom_call.1} parent=0
    _
  %s6 = ssub.s32 1, %s4
  %s7 = scalar_select 0, %s6, %s4
  $region1: #{tpu_custom_call.1} parent=0
    #allocation2 [shape = 'u8[163840]{0}', space=vmem, size = 0x28000, scoped, tag = 'output window, operand 0, single buffered']
    #allocation3 [shape = 's32[1]{0}', space=sflag, size = 0x4, scoped, tag = 'scoped memory for tpu_custom_call.1']
    %8 = vsyncpa [#allocation3], 0
    // Predicated region
    $region2: #{tpu_custom_call.1} parent=1 // pred_check
      _
    $region3: #{tpu_custom_call.1} parent=1 // pred_check_branch
      %10 = sbr.rel (0) target = $region5
    $region4: #{tpu_custom_call.1} parent=1 // pred_region
      _
    $region5: #{tpu_custom_call.1} parent=1 // pred_fallthru
      _
    // Predicated region
    $region6: #{tpu_custom_call.1} parent=1 // pred_check
      _
    $region7: #{tpu_custom_call.1} parent=1 // pred_check_branch
      %12 = sbr.rel (0) target = $region9
    $region8: #{tpu_custom_call.1} parent=1 // pred_region
      _
    $region9: #{tpu_custom_call.1} parent=1 // pred_fallthru
      _
    // Predicated region
    $region10: #{tpu_custom_call.1} parent=1 // pred_check
      _
    $region11: #{tpu_custom_call.1} parent=1 // pred_check_branch
      %14 = sbr.rel (0) target = $region13
    $region12: #{tpu_custom_call.1} parent=1 // pred_region
      _
    $region13: #{tpu_custom_call.1} parent=1 // pred_fallthru
      _
    %v16 = vld [vmem:[%s0] sm:$0xff]
    %v17 = vxor.u32 %v16, 2147483648
    %v18 = vmul.f32 %v17, 1.442695
    %v19 = vpow.pop %v18
    %v20 = vadd.f32 %v19, 1.0
    %v21 = vrcp.pop %v20
    %v22 = vmul.f32 %v20, %v21
    %v23 = vsub.f32 1.0, %v22
    %v24 = vmul.f32 %v21, %v23
    %v25 = vadd.f32 %v21, %v24
    %vm26 = vweird.f32 %v20
    %vm27 = vweird.f32 %v21
    %vm28 = vmor %vm26, %vm27
    %v29 = vsel %vm28, %v21, %v25
    %v30 = vand.u32 2147483647, %v20
    %vm31 = vcmp.eq.f32.partialorder %v30, 8.507059e+37
    %v32 = vand.u32 %v20, 2147483648
    %v33 = vor.u32 1.1754944e-38, %v32
    %v34 = vsel %vm31, %v33, %v29
    %v35 = vmul.f32 1.0, %v34
    %v36 = vld [vmem:[%s1] sm:$0xff]
    %v37 = vld [vmem:[%s1 + $0x8] sm:$0xff]
    %v38 = vld [vmem:[%s1 + $0x10] sm:$0xff]
    %v39 = vld [vmem:[%s1 + $0x18] sm:$0xff]
    %v40 = vld [vmem:[%s1 + $0x20] sm:$0xff]
    %v41 = vld [vmem:[%s1 + $0x28] sm:$0xff]
    %v42 = vld [vmem:[%s1 + $0x30] sm:$0xff]
    %v43 = vld [vmem:[%s1 + $0x38] sm:$0xff]
    %v44 = vld [vmem:[%s1 + $0x40] sm:$0xff]
    %v45 = vld [vmem:[%s1 + $0x48] sm:$0xff]
    %v46 = vld [vmem:[%s1 + $0x50] sm:$0xff]
    %v47 = vld [vmem:[%s1 + $0x58] sm:$0xff]
    %v48 = vld [vmem:[%s1 + $0x60] sm:$0xff]
    %v49 = vld [vmem:[%s1 + $0x68] sm:$0xff]
    %v50 = vld [vmem:[%s1 + $0x70] sm:$0xff]
    %v51 = vld [vmem:[%s1 + $0x78] sm:$0xff]
    %v52 = vld [vmem:[%s1 + $0x80] sm:$0xff]
    %v53 = vld [vmem:[%s1 + $0x88] sm:$0xff]
    %v54 = vld [vmem:[%s1 + $0x90] sm:$0xff]
    %v55 = vld [vmem:[%s1 + $0x98] sm:$0xff]
    %v56 = vld [vmem:[%s1 + $0xa0] sm:$0xff]
    %v57 = vld [vmem:[%s1 + $0xa8] sm:$0xff]
    %v58 = vld [vmem:[%s1 + $0xb0] sm:$0xff]
    %v59 = vld [vmem:[%s1 + $0xb8] sm:$0xff]
    %v60 = vld [vmem:[%s1 + $0xc0] sm:$0xff]
    %v61 = vld [vmem:[%s1 + $0xc8] sm:$0xff]
    %v62 = vld [vmem:[%s1 + $0xd0] sm:$0xff]
    %v63 = vld [vmem:[%s1 + $0xd8] sm:$0xff]
    %v64 = vld [vmem:[%s1 + $0xe0] sm:$0xff]
    %v65 = vld [vmem:[%s1 + $0xe8] sm:$0xff]
    %v66 = vld [vmem:[%s1 + $0xf0] sm:$0xff]
    %v67 = vld [vmem:[%s1 + $0xf8] sm:$0xff]
    %v68 = vld [vmem:[%s1 + $0x100] sm:$0xff]
    %v69 = vld [vmem:[%s1 + $0x108] sm:$0xff]
    %v70 = vld [vmem:[%s1 + $0x110] sm:$0xff]
    %v71 = vld [vmem:[%s1 + $0x118] sm:$0xff]
    %v72 = vld [vmem:[%s1 + $0x120] sm:$0xff]
    %v73 = vld [vmem:[%s1 + $0x128] sm:$0xff]
    %v74 = vld [vmem:[%s1 + $0x130] sm:$0xff]
    %v75 = vld [vmem:[%s1 + $0x138] sm:$0xff]
    %v76 = vld [vmem:[%s1 + $0x140] sm:$0xff]
    %v77 = vld [vmem:[%s1 + $0x148] sm:$0xff]
    %v78 = vld [vmem:[%s1 + $0x150] sm:$0xff]
    %v79 = vld [vmem:[%s1 + $0x158] sm:$0xff]
    %v80 = vld [vmem:[%s1 + $0x160] sm:$0xff]
    %v81 = vld [vmem:[%s1 + $0x168] sm:$0xff]
    %v82 = vld [vmem:[%s1 + $0x170] sm:$0xff]
    %v83 = vld [vmem:[%s1 + $0x178] sm:$0xff]
    %v84 = vld [vmem:[%s1 + $0x180] sm:$0xff]
    %v85 = vld [vmem:[%s1 + $0x188] sm:$0xff]
    %v86 = vld [vmem:[%s1 + $0x190] sm:$0xff]
    %v87 = vld [vmem:[%s1 + $0x198] sm:$0xff]
    %v88 = vld [vmem:[%s1 + $0x1a0] sm:$0xff]
    %v89 = vld [vmem:[%s1 + $0x1a8] sm:$0xff]
    %v90 = vld [vmem:[%s1 + $0x1b0] sm:$0xff]
    %v91 = vld [vmem:[%s1 + $0x1b8] sm:$0xff]
    %v92 = vld [vmem:[%s1 + $0x1c0] sm:$0xff]
    %v93 = vld [vmem:[%s1 + $0x1c8] sm:$0xff]
    %v94 = vld [vmem:[%s1 + $0x1d0] sm:$0xff]
    %v95 = vld [vmem:[%s1 + $0x1d8] sm:$0xff]
    %v96 = vld [vmem:[%s1 + $0x1e0] sm:$0xff]
    %v97 = vld [vmem:[%s1 + $0x1e8] sm:$0xff]
    %v98 = vld [vmem:[%s1 + $0x1f0] sm:$0xff]
    %v99 = vld [vmem:[%s1 + $0x1f8] sm:$0xff]
    %v100 = vld [vmem:[%s1 + $0x200] sm:$0xff]
    %v101 = vld [vmem:[%s1 + $0x208] sm:$0xff]
    %v102 = vld [vmem:[%s1 + $0x210] sm:$0xff]
    %v103 = vld [vmem:[%s1 + $0x218] sm:$0xff]
    %v104 = vld [vmem:[%s1 + $0x220] sm:$0xff]
    %v105 = vld [vmem:[%s1 + $0x228] sm:$0xff]
    %v106 = vld [vmem:[%s1 + $0x230] sm:$0xff]
    %v107 = vld [vmem:[%s1 + $0x238] sm:$0xff]
    %v108 = vld [vmem:[%s1 + $0x240] sm:$0xff]
    %v109 = vld [vmem:[%s1 + $0x248] sm:$0xff]
    %v110 = vld [vmem:[%s1 + $0x250] sm:$0xff]
    %v111 = vld [vmem:[%s1 + $0x258] sm:$0xff]
    %v112 = vld [vmem:[%s1 + $0x260] sm:$0xff]
    %v113 = vld [vmem:[%s1 + $0x268] sm:$0xff]
    %v114 = vld [vmem:[%s1 + $0x270] sm:$0xff]
    %v115 = vld [vmem:[%s1 + $0x278] sm:$0xff]
    %v116 = vunpack.c.l.bf16 %v36
    %v117 = vunpack.c.h.bf16 %v36
    %v118 = vunpack.c.l.bf16 %v37
    %v119 = vunpack.c.h.bf16 %v37
    %v120 = vunpack.c.l.bf16 %v38
    %v121 = vunpack.c.h.bf16 %v38
    %v122 = vunpack.c.l.bf16 %v39
    %v123 = vunpack.c.h.bf16 %v39
    %v124 = vunpack.c.l.bf16 %v40
    %v125 = vunpack.c.h.bf16 %v40
    %v126 = vunpack.c.l.bf16 %v41
    %v127 = vunpack.c.h.bf16 %v41
    %v128 = vunpack.c.l.bf16 %v42
    %v129 = vunpack.c.h.bf16 %v42
    %v130 = vunpack.c.l.bf16 %v43
    %v131 = vunpack.c.h.bf16 %v43
    %v132 = vunpack.c.l.bf16 %v44
    %v133 = vunpack.c.h.bf16 %v44
    %v134 = vunpack.c.l.bf16 %v45
    %v135 = vunpack.c.h.bf16 %v45
    %v136 = vunpack.c.l.bf16 %v46
    %v137 = vunpack.c.h.bf16 %v46
    %v138 = vunpack.c.l.bf16 %v47
    %v139 = vunpack.c.h.bf16 %v47
    %v140 = vunpack.c.l.bf16 %v48
    %v141 = vunpack.c.h.bf16 %v48
    %v142 = vunpack.c.l.bf16 %v49
    %v143 = vunpack.c.h.bf16 %v49
    %v144 = vunpack.c.l.bf16 %v50
    %v145 = vunpack.c.h.bf16 %v50
    %v146 = vunpack.c.l.bf16 %v51
    %v147 = vunpack.c.h.bf16 %v51
    %v148 = vunpack.c.l.bf16 %v52
    %v149 = vunpack.c.h.bf16 %v52
    %v150 = vunpack.c.l.bf16 %v53
    %v151 = vunpack.c.h.bf16 %v53
    %v152 = vunpack.c.l.bf16 %v54
    %v153 = vunpack.c.h.bf16 %v54
    %v154 = vunpack.c.l.bf16 %v55
    %v155 = vunpack.c.h.bf16 %v55
    %v156 = vunpack.c.l.bf16 %v56
    %v157 = vunpack.c.h.bf16 %v56
    %v158 = vunpack.c.l.bf16 %v57
    %v159 = vunpack.c.h.bf16 %v57
    %v160 = vunpack.c.l.bf16 %v58
    %v161 = vunpack.c.h.bf16 %v58
    %v162 = vunpack.c.l.bf16 %v59
    %v163 = vunpack.c.h.bf16 %v59
    %v164 = vunpack.c.l.bf16 %v60
    %v165 = vunpack.c.h.bf16 %v60
    %v166 = vunpack.c.l.bf16 %v61
    %v167 = vunpack.c.h.bf16 %v61
    %v168 = vunpack.c.l.bf16 %v62
    %v169 = vunpack.c.h.bf16 %v62
    %v170 = vunpack.c.l.bf16 %v63
    %v171 = vunpack.c.h.bf16 %v63
    %v172 = vunpack.c.l.bf16 %v64
    %v173 = vunpack.c.h.bf16 %v64
    %v174 = vunpack.c.l.bf16 %v65
    %v175 = vunpack.c.h.bf16 %v65
    %v176 = vunpack.c.l.bf16 %v66
    %v177 = vunpack.c.h.bf16 %v66
    %v178 = vunpack.c.l.bf16 %v67
    %v179 = vunpack.c.h.bf16 %v67
    %v180 = vunpack.c.l.bf16 %v68
    %v181 = vunpack.c.h.bf16 %v68
    %v182 = vunpack.c.l.bf16 %v69
    %v183 = vunpack.c.h.bf16 %v69
    %v184 = vunpack.c.l.bf16 %v70
    %v185 = vunpack.c.h.bf16 %v70
    %v186 = vunpack.c.l.bf16 %v71
    %v187 = vunpack.c.h.bf16 %v71
    %v188 = vunpack.c.l.bf16 %v72
    %v189 = vunpack.c.h.bf16 %v72
    %v190 = vunpack.c.l.bf16 %v73
    %v191 = vunpack.c.h.bf16 %v73
    %v192 = vunpack.c.l.bf16 %v74
    %v193 = vunpack.c.h.bf16 %v74
    %v194 = vunpack.c.l.bf16 %v75
    %v195 = vunpack.c.h.bf16 %v75
    %v196 = vunpack.c.l.bf16 %v76
    %v197 = vunpack.c.h.bf16 %v76
    %v198 = vunpack.c.l.bf16 %v77
    %v199 = vunpack.c.h.bf16 %v77
    %v200 = vunpack.c.l.bf16 %v78
    %v201 = vunpack.c.h.bf16 %v78
    %v202 = vunpack.c.l.bf16 %v79
    %v203 = vunpack.c.h.bf16 %v79
    %v204 = vunpack.c.l.bf16 %v80
    %v205 = vunpack.c.h.bf16 %v80
    %v206 = vunpack.c.l.bf16 %v81
    %v207 = vunpack.c.h.bf16 %v81
    %v208 = vunpack.c.l.bf16 %v82
    %v209 = vunpack.c.h.bf16 %v82
    %v210 = vunpack.c.l.bf16 %v83
    %v211 = vunpack.c.h.bf16 %v83
    %v212 = vunpack.c.l.bf16 %v84
    %v213 = vunpack.c.h.bf16 %v84
    %v214 = vunpack.c.l.bf16 %v85
    %v215 = vunpack.c.h.bf16 %v85
    %v216 = vunpack.c.l.bf16 %v86
    %v217 = vunpack.c.h.bf16 %v86
    %v218 = vunpack.c.l.bf16 %v87
    %v219 = vunpack.c.h.bf16 %v87
    %v220 = vunpack.c.l.bf16 %v88
    %v221 = vunpack.c.h.bf16 %v88
    %v222 = vunpack.c.l.bf16 %v89
    %v223 = vunpack.c.h.bf16 %v89
    %v224 = vunpack.c.l.bf16 %v90
    %v225 = vunpack.c.h.bf16 %v90
    %v226 = vunpack.c.l.bf16 %v91
    %v227 = vunpack.c.h.bf16 %v91
    %v228 = vunpack.c.l.bf16 %v92
    %v229 = vunpack.c.h.bf16 %v92
    %v230 = vunpack.c.l.bf16 %v93
    %v231 = vunpack.c.h.bf16 %v93
    %v232 = vunpack.c.l.bf16 %v94
    %v233 = vunpack.c.h.bf16 %v94
    %v234 = vunpack.c.l.bf16 %v95
    %v235 = vunpack.c.h.bf16 %v95
    %v236 = vunpack.c.l.bf16 %v96
    %v237 = vunpack.c.h.bf16 %v96
    %v238 = vunpack.c.l.bf16 %v97
    %v239 = vunpack.c.h.bf16 %v97
    %v240 = vunpack.c.l.bf16 %v98
    %v241 = vunpack.c.h.bf16 %v98
    %v242 = vunpack.c.l.bf16 %v99
    %v243 = vunpack.c.h.bf16 %v99
    %v244 = vunpack.c.l.bf16 %v100
    %v245 = vunpack.c.h.bf16 %v100
    %v246 = vunpack.c.l.bf16 %v101
    %v247 = vunpack.c.h.bf16 %v101
    %v248 = vunpack.c.l.bf16 %v102
    %v249 = vunpack.c.h.bf16 %v102
    %v250 = vunpack.c.l.bf16 %v103
    %v251 = vunpack.c.h.bf16 %v103
    %v252 = vunpack.c.l.bf16 %v104
    %v253 = vunpack.c.h.bf16 %v104
    %v254 = vunpack.c.l.bf16 %v105
    %v255 = vunpack.c.h.bf16 %v105
    %v256 = vunpack.c.l.bf16 %v106
    %v257 = vunpack.c.h.bf16 %v106
    %v258 = vunpack.c.l.bf16 %v107
    %v259 = vunpack.c.h.bf16 %v107
    %v260 = vunpack.c.l.bf16 %v108
    %v261 = vunpack.c.h.bf16 %v108
    %v262 = vunpack.c.l.bf16 %v109
    %v263 = vunpack.c.h.bf16 %v109
    %v264 = vunpack.c.l.bf16 %v110
    %v265 = vunpack.c.h.bf16 %v110
    %v266 = vunpack.c.l.bf16 %v111
    %v267 = vunpack.c.h.bf16 %v111
    %v268 = vunpack.c.l.bf16 %v112
    %v269 = vunpack.c.h.bf16 %v112
    %v270 = vunpack.c.l.bf16 %v113
    %v271 = vunpack.c.h.bf16 %v113
    %v272 = vunpack.c.l.bf16 %v114
    %v273 = vunpack.c.h.bf16 %v114
    %v274 = vunpack.c.l.bf16 %v115
    %v275 = vunpack.c.h.bf16 %v115
    %v277 = vperm.slane %v35, 0
    %v278 = vperm.slane %v35, 1
    %v279 = vperm.slane %v35, 2
    %v280 = vperm.slane %v35, 3
    %v281 = vperm.slane %v35, 4
    %v282 = vperm.slane %v35, 5
    %v283 = vperm.slane %v35, 6
    %v284 = vperm.slane %v35, 7
    %v293 = vmul.f32 %v116, %v277
    %v294 = vmul.f32 %v117, %v278
    %v295 = vmul.f32 %v118, %v279
    %v296 = vmul.f32 %v119, %v280
    %v297 = vmul.f32 %v120, %v281
    %v298 = vmul.f32 %v121, %v282
    %v299 = vmul.f32 %v122, %v283
    %v300 = vmul.f32 %v123, %v284
    %v301 = vmul.f32 %v124, %v277
    %v302 = vmul.f32 %v125, %v278
    %v303 = vmul.f32 %v126, %v279
    %v304 = vmul.f32 %v127, %v280
    %v305 = vmul.f32 %v128, %v281
    %v306 = vmul.f32 %v129, %v282
    %v307 = vmul.f32 %v130, %v283
    %v308 = vmul.f32 %v131, %v284
    %v309 = vmul.f32 %v132, %v277
    %v310 = vmul.f32 %v133, %v278
    %v311 = vmul.f32 %v134, %v279
    %v312 = vmul.f32 %v135, %v280
    %v313 = vmul.f32 %v136, %v281
    %v314 = vmul.f32 %v137, %v282
    %v315 = vmul.f32 %v138, %v283
    %v316 = vmul.f32 %v139, %v284
    %v317 = vmul.f32 %v140, %v277
    %v318 = vmul.f32 %v141, %v278
    %v319 = vmul.f32 %v142, %v279
    %v320 = vmul.f32 %v143, %v280
    %v321 = vmul.f32 %v144, %v281
    %v322 = vmul.f32 %v145, %v282
    %v323 = vmul.f32 %v146, %v283
    %v324 = vmul.f32 %v147, %v284
    %v325 = vmul.f32 %v148, %v277
    %v326 = vmul.f32 %v149, %v278
    %v327 = vmul.f32 %v150, %v279
    %v328 = vmul.f32 %v151, %v280
    %v329 = vmul.f32 %v152, %v281
    %v330 = vmul.f32 %v153, %v282
    %v331 = vmul.f32 %v154, %v283
    %v332 = vmul.f32 %v155, %v284
    %v333 = vmul.f32 %v156, %v277
    %v334 = vmul.f32 %v157, %v278
    %v335 = vmul.f32 %v158, %v279
    %v336 = vmul.f32 %v159, %v280
    %v337 = vmul.f32 %v160, %v281
    %v338 = vmul.f32 %v161, %v282
    %v339 = vmul.f32 %v162, %v283
    %v340 = vmul.f32 %v163, %v284
    %v341 = vmul.f32 %v164, %v277
    %v342 = vmul.f32 %v165, %v278
    %v343 = vmul.f32 %v166, %v279
    %v344 = vmul.f32 %v167, %v280
    %v345 = vmul.f32 %v168, %v281
    %v346 = vmul.f32 %v169, %v282
    %v347 = vmul.f32 %v170, %v283
    %v348 = vmul.f32 %v171, %v284
    %v349 = vmul.f32 %v172, %v277
    %v350 = vmul.f32 %v173, %v278
    %v351 = vmul.f32 %v174, %v279
    %v352 = vmul.f32 %v175, %v280
    %v353 = vmul.f32 %v176, %v281
    %v354 = vmul.f32 %v177, %v282
    %v355 = vmul.f32 %v178, %v283
    %v356 = vmul.f32 %v179, %v284
    %v357 = vmul.f32 %v180, %v277
    %v358 = vmul.f32 %v181, %v278
    %v359 = vmul.f32 %v182, %v279
    %v360 = vmul.f32 %v183, %v280
    %v361 = vmul.f32 %v184, %v281
    %v362 = vmul.f32 %v185, %v282
    %v363 = vmul.f32 %v186, %v283
    %v364 = vmul.f32 %v187, %v284
    %v365 = vmul.f32 %v188, %v277
    %v366 = vmul.f32 %v189, %v278
    %v367 = vmul.f32 %v190, %v279
    %v368 = vmul.f32 %v191, %v280
    %v369 = vmul.f32 %v192, %v281
    %v370 = vmul.f32 %v193, %v282
    %v371 = vmul.f32 %v194, %v283
    %v372 = vmul.f32 %v195, %v284
    %v373 = vmul.f32 %v196, %v277
    %v374 = vmul.f32 %v197, %v278
    %v375 = vmul.f32 %v198, %v279
    %v376 = vmul.f32 %v199, %v280
    %v377 = vmul.f32 %v200, %v281
    %v378 = vmul.f32 %v201, %v282
    %v379 = vmul.f32 %v202, %v283
    %v380 = vmul.f32 %v203, %v284
    %v381 = vmul.f32 %v204, %v277
    %v382 = vmul.f32 %v205, %v278
    %v383 = vmul.f32 %v206, %v279
    %v384 = vmul.f32 %v207, %v280
    %v385 = vmul.f32 %v208, %v281
    %v386 = vmul.f32 %v209, %v282
    %v387 = vmul.f32 %v210, %v283
    %v388 = vmul.f32 %v211, %v284
    %v389 = vmul.f32 %v212, %v277
    %v390 = vmul.f32 %v213, %v278
    %v391 = vmul.f32 %v214, %v279
    %v392 = vmul.f32 %v215, %v280
    %v393 = vmul.f32 %v216, %v281
    %v394 = vmul.f32 %v217, %v282
    %v395 = vmul.f32 %v218, %v283
    %v396 = vmul.f32 %v219, %v284
    %v397 = vmul.f32 %v220, %v277
    %v398 = vmul.f32 %v221, %v278
    %v399 = vmul.f32 %v222, %v279
    %v400 = vmul.f32 %v223, %v280
    %v401 = vmul.f32 %v224, %v281
    %v402 = vmul.f32 %v225, %v282
    %v403 = vmul.f32 %v226, %v283
    %v404 = vmul.f32 %v227, %v284
    %v405 = vmul.f32 %v228, %v277
    %v406 = vmul.f32 %v229, %v278
    %v407 = vmul.f32 %v230, %v279
    %v408 = vmul.f32 %v231, %v280
    %v409 = vmul.f32 %v232, %v281
    %v410 = vmul.f32 %v233, %v282
    %v411 = vmul.f32 %v234, %v283
    %v412 = vmul.f32 %v235, %v284
    %v413 = vmul.f32 %v236, %v277
    %v414 = vmul.f32 %v237, %v278
    %v415 = vmul.f32 %v238, %v279
    %v416 = vmul.f32 %v239, %v280
    %v417 = vmul.f32 %v240, %v281
    %v418 = vmul.f32 %v241, %v282
    %v419 = vmul.f32 %v242, %v283
    %v420 = vmul.f32 %v243, %v284
    %v421 = vmul.f32 %v244, %v277
    %v422 = vmul.f32 %v245, %v278
    %v423 = vmul.f32 %v246, %v279
    %v424 = vmul.f32 %v247, %v280
    %v425 = vmul.f32 %v248, %v281
    %v426 = vmul.f32 %v249, %v282
    %v427 = vmul.f32 %v250, %v283
    %v428 = vmul.f32 %v251, %v284
    %v429 = vmul.f32 %v252, %v277
    %v430 = vmul.f32 %v253, %v278
    %v431 = vmul.f32 %v254, %v279
    %v432 = vmul.f32 %v255, %v280
    %v433 = vmul.f32 %v256, %v281
    %v434 = vmul.f32 %v257, %v282
    %v435 = vmul.f32 %v258, %v283
    %v436 = vmul.f32 %v259, %v284
    %v437 = vmul.f32 %v260, %v277
    %v438 = vmul.f32 %v261, %v278
    %v439 = vmul.f32 %v262, %v279
    %v440 = vmul.f32 %v263, %v280
    %v441 = vmul.f32 %v264, %v281
    %v442 = vmul.f32 %v265, %v282
    %v443 = vmul.f32 %v266, %v283
    %v444 = vmul.f32 %v267, %v284
    %v445 = vmul.f32 %v268, %v277
    %v446 = vmul.f32 %v269, %v278
    %v447 = vmul.f32 %v270, %v279
    %v448 = vmul.f32 %v271, %v280
    %v449 = vmul.f32 %v272, %v281
    %v450 = vmul.f32 %v273, %v282
    %v451 = vmul.f32 %v274, %v283
    %v452 = vmul.f32 %v275, %v284
    %v453 = vpack.c.bf16 %v301, %v293
    %v454 = vpack.c.bf16 %v302, %v294
    %v455 = vpack.c.bf16 %v303, %v295
    %v456 = vpack.c.bf16 %v304, %v296
    %v457 = vpack.c.bf16 %v305, %v297
    %v458 = vpack.c.bf16 %v306, %v298
    %v459 = vpack.c.bf16 %v307, %v299
    %v460 = vpack.c.bf16 %v308, %v300
    %v461 = vpack.c.bf16 %v317, %v309
    %v462 = vpack.c.bf16 %v318, %v310
    %v463 = vpack.c.bf16 %v319, %v311
    %v464 = vpack.c.bf16 %v320, %v312
    %v465 = vpack.c.bf16 %v321, %v313
    %v466 = vpack.c.bf16 %v322, %v314
    %v467 = vpack.c.bf16 %v323, %v315
    %v468 = vpack.c.bf16 %v324, %v316
    %v469 = vpack.c.bf16 %v333, %v325
    %v470 = vpack.c.bf16 %v334, %v326
    %v471 = vpack.c.bf16 %v335, %v327
    %v472 = vpack.c.bf16 %v336, %v328
    %v473 = vpack.c.bf16 %v337, %v329
    %v474 = vpack.c.bf16 %v338, %v330
    %v475 = vpack.c.bf16 %v339, %v331
    %v476 = vpack.c.bf16 %v340, %v332
    %v477 = vpack.c.bf16 %v349, %v341
    %v478 = vpack.c.bf16 %v350, %v342
    %v479 = vpack.c.bf16 %v351, %v343
    %v480 = vpack.c.bf16 %v352, %v344
    %v481 = vpack.c.bf16 %v353, %v345
    %v482 = vpack.c.bf16 %v354, %v346
    %v483 = vpack.c.bf16 %v355, %v347
    %v484 = vpack.c.bf16 %v356, %v348
    %v485 = vpack.c.bf16 %v365, %v357
    %v486 = vpack.c.bf16 %v366, %v358
    %v487 = vpack.c.bf16 %v367, %v359
    %v488 = vpack.c.bf16 %v368, %v360
    %v489 = vpack.c.bf16 %v369, %v361
    %v490 = vpack.c.bf16 %v370, %v362
    %v491 = vpack.c.bf16 %v371, %v363
    %v492 = vpack.c.bf16 %v372, %v364
    %v493 = vpack.c.bf16 %v381, %v373
    %v494 = vpack.c.bf16 %v382, %v374
    %v495 = vpack.c.bf16 %v383, %v375
    %v496 = vpack.c.bf16 %v384, %v376
    %v497 = vpack.c.bf16 %v385, %v377
    %v498 = vpack.c.bf16 %v386, %v378
    %v499 = vpack.c.bf16 %v387, %v379
    %v500 = vpack.c.bf16 %v388, %v380
    %v501 = vpack.c.bf16 %v397, %v389
    %v502 = vpack.c.bf16 %v398, %v390
    %v503 = vpack.c.bf16 %v399, %v391
    %v504 = vpack.c.bf16 %v400, %v392
    %v505 = vpack.c.bf16 %v401, %v393
    %v506 = vpack.c.bf16 %v402, %v394
    %v507 = vpack.c.bf16 %v403, %v395
    %v508 = vpack.c.bf16 %v404, %v396
    %v509 = vpack.c.bf16 %v413, %v405
    %v510 = vpack.c.bf16 %v414, %v406
    %v511 = vpack.c.bf16 %v415, %v407
    %v512 = vpack.c.bf16 %v416, %v408
    %v513 = vpack.c.bf16 %v417, %v409
    %v514 = vpack.c.bf16 %v418, %v410
    %v515 = vpack.c.bf16 %v419, %v411
    %v516 = vpack.c.bf16 %v420, %v412
    %v517 = vpack.c.bf16 %v429, %v421
    %v518 = vpack.c.bf16 %v430, %v422
    %v519 = vpack.c.bf16 %v431, %v423
    %v520 = vpack.c.bf16 %v432, %v424
    %v521 = vpack.c.bf16 %v433, %v425
    %v522 = vpack.c.bf16 %v434, %v426
    %v523 = vpack.c.bf16 %v435, %v427
    %v524 = vpack.c.bf16 %v436, %v428
    %v525 = vpack.c.bf16 %v445, %v437
    %v526 = vpack.c.bf16 %v446, %v438
    %v527 = vpack.c.bf16 %v447, %v439
    %v528 = vpack.c.bf16 %v448, %v440
    %v529 = vpack.c.bf16 %v449, %v441
    %v530 = vpack.c.bf16 %v450, %v442
    %v531 = vpack.c.bf16 %v451, %v443
    %v532 = vpack.c.bf16 %v452, %v444
    %v533 = vld [vmem:[%s2] sm:$0xff]
    %v534 = vld [vmem:[%s2 + $0x8] sm:$0xff]
    %v535 = vld [vmem:[%s2 + $0x10] sm:$0xff]
    %v536 = vld [vmem:[%s2 + $0x18] sm:$0xff]
    %v537 = vld [vmem:[%s2 + $0x20] sm:$0xff]
    %v538 = vld [vmem:[%s2 + $0x28] sm:$0xff]
    %v539 = vld [vmem:[%s2 + $0x30] sm:$0xff]
    %v540 = vld [vmem:[%s2 + $0x38] sm:$0xff]
    %v541 = vld [vmem:[%s2 + $0x40] sm:$0xff]
    %v542 = vld [vmem:[%s2 + $0x48] sm:$0xff]
    %v543 = vld [vmem:[%s2 + $0x50] sm:$0xff]
    %v544 = vld [vmem:[%s2 + $0x58] sm:$0xff]
    %v545 = vld [vmem:[%s2 + $0x60] sm:$0xff]
    %v546 = vld [vmem:[%s2 + $0x68] sm:$0xff]
    %v547 = vld [vmem:[%s2 + $0x70] sm:$0xff]
    %v548 = vld [vmem:[%s2 + $0x78] sm:$0xff]
    %v549 = vld [vmem:[%s2 + $0x80] sm:$0xff]
    %v550 = vld [vmem:[%s2 + $0x88] sm:$0xff]
    %v551 = vld [vmem:[%s2 + $0x90] sm:$0xff]
    %v552 = vld [vmem:[%s2 + $0x98] sm:$0xff]
    %v553 = vld [vmem:[%s2 + $0xa0] sm:$0xff]
    %v554 = vld [vmem:[%s2 + $0xa8] sm:$0xff]
    %v555 = vld [vmem:[%s2 + $0xb0] sm:$0xff]
    %v556 = vld [vmem:[%s2 + $0xb8] sm:$0xff]
    %v557 = vld [vmem:[%s2 + $0xc0] sm:$0xff]
    %v558 = vld [vmem:[%s2 + $0xc8] sm:$0xff]
    %v559 = vld [vmem:[%s2 + $0xd0] sm:$0xff]
    %v560 = vld [vmem:[%s2 + $0xd8] sm:$0xff]
    %v561 = vld [vmem:[%s2 + $0xe0] sm:$0xff]
    %v562 = vld [vmem:[%s2 + $0xe8] sm:$0xff]
    %v563 = vld [vmem:[%s2 + $0xf0] sm:$0xff]
    %v564 = vld [vmem:[%s2 + $0xf8] sm:$0xff]
    %v565 = vld [vmem:[%s2 + $0x100] sm:$0xff]
    %v566 = vld [vmem:[%s2 + $0x108] sm:$0xff]
    %v567 = vld [vmem:[%s2 + $0x110] sm:$0xff]
    %v568 = vld [vmem:[%s2 + $0x118] sm:$0xff]
    %v569 = vld [vmem:[%s2 + $0x120] sm:$0xff]
    %v570 = vld [vmem:[%s2 + $0x128] sm:$0xff]
    %v571 = vld [vmem:[%s2 + $0x130] sm:$0xff]
    %v572 = vld [vmem:[%s2 + $0x138] sm:$0xff]
    %v573 = vld [vmem:[%s2 + $0x140] sm:$0xff]
    %v574 = vld [vmem:[%s2 + $0x148] sm:$0xff]
    %v575 = vld [vmem:[%s2 + $0x150] sm:$0xff]
    %v576 = vld [vmem:[%s2 + $0x158] sm:$0xff]
    %v577 = vld [vmem:[%s2 + $0x160] sm:$0xff]
    %v578 = vld [vmem:[%s2 + $0x168] sm:$0xff]
    %v579 = vld [vmem:[%s2 + $0x170] sm:$0xff]
    %v580 = vld [vmem:[%s2 + $0x178] sm:$0xff]
    %v581 = vld [vmem:[%s2 + $0x180] sm:$0xff]
    %v582 = vld [vmem:[%s2 + $0x188] sm:$0xff]
    %v583 = vld [vmem:[%s2 + $0x190] sm:$0xff]
    %v584 = vld [vmem:[%s2 + $0x198] sm:$0xff]
    %v585 = vld [vmem:[%s2 + $0x1a0] sm:$0xff]
    %v586 = vld [vmem:[%s2 + $0x1a8] sm:$0xff]
    %v587 = vld [vmem:[%s2 + $0x1b0] sm:$0xff]
    %v588 = vld [vmem:[%s2 + $0x1b8] sm:$0xff]
    %v589 = vld [vmem:[%s2 + $0x1c0] sm:$0xff]
    %v590 = vld [vmem:[%s2 + $0x1c8] sm:$0xff]
    %v591 = vld [vmem:[%s2 + $0x1d0] sm:$0xff]
    %v592 = vld [vmem:[%s2 + $0x1d8] sm:$0xff]
    %v593 = vld [vmem:[%s2 + $0x1e0] sm:$0xff]
    %v594 = vld [vmem:[%s2 + $0x1e8] sm:$0xff]
    %v595 = vld [vmem:[%s2 + $0x1f0] sm:$0xff]
    %v596 = vld [vmem:[%s2 + $0x1f8] sm:$0xff]
    %v597 = vld [vmem:[%s2 + $0x200] sm:$0xff]
    %v598 = vld [vmem:[%s2 + $0x208] sm:$0xff]
    %v599 = vld [vmem:[%s2 + $0x210] sm:$0xff]
    %v600 = vld [vmem:[%s2 + $0x218] sm:$0xff]
    %v601 = vld [vmem:[%s2 + $0x220] sm:$0xff]
    %v602 = vld [vmem:[%s2 + $0x228] sm:$0xff]
    %v603 = vld [vmem:[%s2 + $0x230] sm:$0xff]
    %v604 = vld [vmem:[%s2 + $0x238] sm:$0xff]
    %v605 = vld [vmem:[%s2 + $0x240] sm:$0xff]
    %v606 = vld [vmem:[%s2 + $0x248] sm:$0xff]
    %v607 = vld [vmem:[%s2 + $0x250] sm:$0xff]
    %v608 = vld [vmem:[%s2 + $0x258] sm:$0xff]
    %v609 = vld [vmem:[%s2 + $0x260] sm:$0xff]
    %v610 = vld [vmem:[%s2 + $0x268] sm:$0xff]
    %v611 = vld [vmem:[%s2 + $0x270] sm:$0xff]
    %v612 = vld [vmem:[%s2 + $0x278] sm:$0xff]
    %v613 = vld [vmem:[%s2 + $0x280] sm:$0xff]
    %v614 = vld [vmem:[%s2 + $0x288] sm:$0xff]
    %v615 = vld [vmem:[%s2 + $0x290] sm:$0xff]
    %v616 = vld [vmem:[%s2 + $0x298] sm:$0xff]
    %v617 = vld [vmem:[%s2 + $0x2a0] sm:$0xff]
    %v618 = vld [vmem:[%s2 + $0x2a8] sm:$0xff]
    %v619 = vld [vmem:[%s2 + $0x2b0] sm:$0xff]
    %v620 = vld [vmem:[%s2 + $0x2b8] sm:$0xff]
    %v621 = vld [vmem:[%s2 + $0x2c0] sm:$0xff]
    %v622 = vld [vmem:[%s2 + $0x2c8] sm:$0xff]
    %v623 = vld [vmem:[%s2 + $0x2d0] sm:$0xff]
    %v624 = vld [vmem:[%s2 + $0x2d8] sm:$0xff]
    %v625 = vld [vmem:[%s2 + $0x2e0] sm:$0xff]
    %v626 = vld [vmem:[%s2 + $0x2e8] sm:$0xff]
    %v627 = vld [vmem:[%s2 + $0x2f0] sm:$0xff]
    %v628 = vld [vmem:[%s2 + $0x2f8] sm:$0xff]
    %v629 = vld [vmem:[%s2 + $0x300] sm:$0xff]
    %v630 = vld [vmem:[%s2 + $0x308] sm:$0xff]
    %v631 = vld [vmem:[%s2 + $0x310] sm:$0xff]
    %v632 = vld [vmem:[%s2 + $0x318] sm:$0xff]
    %v633 = vld [vmem:[%s2 + $0x320] sm:$0xff]
    %v634 = vld [vmem:[%s2 + $0x328] sm:$0xff]
    %v635 = vld [vmem:[%s2 + $0x330] sm:$0xff]
    %v636 = vld [vmem:[%s2 + $0x338] sm:$0xff]
    %v637 = vld [vmem:[%s2 + $0x340] sm:$0xff]
    %v638 = vld [vmem:[%s2 + $0x348] sm:$0xff]
    %v639 = vld [vmem:[%s2 + $0x350] sm:$0xff]
    %v640 = vld [vmem:[%s2 + $0x358] sm:$0xff]
    %v641 = vld [vmem:[%s2 + $0x360] sm:$0xff]
    %v642 = vld [vmem:[%s2 + $0x368] sm:$0xff]
    %v643 = vld [vmem:[%s2 + $0x370] sm:$0xff]
    %v644 = vld [vmem:[%s2 + $0x378] sm:$0xff]
    %v645 = vld [vmem:[%s2 + $0x380] sm:$0xff]
    %v646 = vld [vmem:[%s2 + $0x388] sm:$0xff]
    %v647 = vld [vmem:[%s2 + $0x390] sm:$0xff]
    %v648 = vld [vmem:[%s2 + $0x398] sm:$0xff]
    %v649 = vld [vmem:[%s2 + $0x3a0] sm:$0xff]
    %v650 = vld [vmem:[%s2 + $0x3a8] sm:$0xff]
    %v651 = vld [vmem:[%s2 + $0x3b0] sm:$0xff]
    %v652 = vld [vmem:[%s2 + $0x3b8] sm:$0xff]
    %v653 = vld [vmem:[%s2 + $0x3c0] sm:$0xff]
    %v654 = vld [vmem:[%s2 + $0x3c8] sm:$0xff]
    %v655 = vld [vmem:[%s2 + $0x3d0] sm:$0xff]
    %v656 = vld [vmem:[%s2 + $0x3d8] sm:$0xff]
    %v657 = vld [vmem:[%s2 + $0x3e0] sm:$0xff]
    %v658 = vld [vmem:[%s2 + $0x3e8] sm:$0xff]
    %v659 = vld [vmem:[%s2 + $0x3f0] sm:$0xff]
    %v660 = vld [vmem:[%s2 + $0x3f8] sm:$0xff]
    %v661 = vld [vmem:[%s2 + $0x400] sm:$0xff]
    %v662 = vld [vmem:[%s2 + $0x408] sm:$0xff]
    %v663 = vld [vmem:[%s2 + $0x410] sm:$0xff]
    %v664 = vld [vmem:[%s2 + $0x418] sm:$0xff]
    %v665 = vld [vmem:[%s2 + $0x420] sm:$0xff]
    %v666 = vld [vmem:[%s2 + $0x428] sm:$0xff]
    %v667 = vld [vmem:[%s2 + $0x430] sm:$0xff]
    %v668 = vld [vmem:[%s2 + $0x438] sm:$0xff]
    %v669 = vld [vmem:[%s2 + $0x440] sm:$0xff]
    %v670 = vld [vmem:[%s2 + $0x448] sm:$0xff]
    %v671 = vld [vmem:[%s2 + $0x450] sm:$0xff]
    %v672 = vld [vmem:[%s2 + $0x458] sm:$0xff]
    %v673 = vld [vmem:[%s2 + $0x460] sm:$0xff]
    %v674 = vld [vmem:[%s2 + $0x468] sm:$0xff]
    %v675 = vld [vmem:[%s2 + $0x470] sm:$0xff]
    %v676 = vld [vmem:[%s2 + $0x478] sm:$0xff]
    %v677 = vld [vmem:[%s2 + $0x480] sm:$0xff]
    %v678 = vld [vmem:[%s2 + $0x488] sm:$0xff]
    %v679 = vld [vmem:[%s2 + $0x490] sm:$0xff]
    %v680 = vld [vmem:[%s2 + $0x498] sm:$0xff]
    %v681 = vld [vmem:[%s2 + $0x4a0] sm:$0xff]
    %v682 = vld [vmem:[%s2 + $0x4a8] sm:$0xff]
    %v683 = vld [vmem:[%s2 + $0x4b0] sm:$0xff]
    %v684 = vld [vmem:[%s2 + $0x4b8] sm:$0xff]
    %v685 = vld [vmem:[%s2 + $0x4c0] sm:$0xff]
    %v686 = vld [vmem:[%s2 + $0x4c8] sm:$0xff]
    %v687 = vld [vmem:[%s2 + $0x4d0] sm:$0xff]
    %v688 = vld [vmem:[%s2 + $0x4d8] sm:$0xff]
    %v689 = vld [vmem:[%s2 + $0x4e0] sm:$0xff]
    %v690 = vld [vmem:[%s2 + $0x4e8] sm:$0xff]
    %v691 = vld [vmem:[%s2 + $0x4f0] sm:$0xff]
    %v692 = vld [vmem:[%s2 + $0x4f8] sm:$0xff]
    %v693 = vld [vmem:[%s2 + $0x500] sm:$0xff]
    %v694 = vld [vmem:[%s2 + $0x508] sm:$0xff]
    %v695 = vld [vmem:[%s2 + $0x510] sm:$0xff]
    %v696 = vld [vmem:[%s2 + $0x518] sm:$0xff]
    %v697 = vld [vmem:[%s2 + $0x520] sm:$0xff]
    %v698 = vld [vmem:[%s2 + $0x528] sm:$0xff]
    %v699 = vld [vmem:[%s2 + $0x530] sm:$0xff]
    %v700 = vld [vmem:[%s2 + $0x538] sm:$0xff]
    %v701 = vld [vmem:[%s2 + $0x540] sm:$0xff]
    %v702 = vld [vmem:[%s2 + $0x548] sm:$0xff]
    %v703 = vld [vmem:[%s2 + $0x550] sm:$0xff]
    %v704 = vld [vmem:[%s2 + $0x558] sm:$0xff]
    %v705 = vld [vmem:[%s2 + $0x560] sm:$0xff]
    %v706 = vld [vmem:[%s2 + $0x568] sm:$0xff]
    %v707 = vld [vmem:[%s2 + $0x570] sm:$0xff]
    %v708 = vld [vmem:[%s2 + $0x578] sm:$0xff]
    %v709 = vld [vmem:[%s2 + $0x580] sm:$0xff]
    %v710 = vld [vmem:[%s2 + $0x588] sm:$0xff]
    %v711 = vld [vmem:[%s2 + $0x590] sm:$0xff]
    %v712 = vld [vmem:[%s2 + $0x598] sm:$0xff]
    %v713 = vld [vmem:[%s2 + $0x5a0] sm:$0xff]
    %v714 = vld [vmem:[%s2 + $0x5a8] sm:$0xff]
    %v715 = vld [vmem:[%s2 + $0x5b0] sm:$0xff]
    %v716 = vld [vmem:[%s2 + $0x5b8] sm:$0xff]
    %v717 = vld [vmem:[%s2 + $0x5c0] sm:$0xff]
    %v718 = vld [vmem:[%s2 + $0x5c8] sm:$0xff]
    %v719 = vld [vmem:[%s2 + $0x5d0] sm:$0xff]
    %v720 = vld [vmem:[%s2 + $0x5d8] sm:$0xff]
    %v721 = vld [vmem:[%s2 + $0x5e0] sm:$0xff]
    %v722 = vld [vmem:[%s2 + $0x5e8] sm:$0xff]
    %v723 = vld [vmem:[%s2 + $0x5f0] sm:$0xff]
    %v724 = vld [vmem:[%s2 + $0x5f8] sm:$0xff]
    %v725 = vld [vmem:[%s2 + $0x600] sm:$0xff]
    %v726 = vld [vmem:[%s2 + $0x608] sm:$0xff]
    %v727 = vld [vmem:[%s2 + $0x610] sm:$0xff]
    %v728 = vld [vmem:[%s2 + $0x618] sm:$0xff]
    %v729 = vld [vmem:[%s2 + $0x620] sm:$0xff]
    %v730 = vld [vmem:[%s2 + $0x628] sm:$0xff]
    %v731 = vld [vmem:[%s2 + $0x630] sm:$0xff]
    %v732 = vld [vmem:[%s2 + $0x638] sm:$0xff]
    %v733 = vld [vmem:[%s2 + $0x640] sm:$0xff]
    %v734 = vld [vmem:[%s2 + $0x648] sm:$0xff]
    %v735 = vld [vmem:[%s2 + $0x650] sm:$0xff]
    %v736 = vld [vmem:[%s2 + $0x658] sm:$0xff]
    %v737 = vld [vmem:[%s2 + $0x660] sm:$0xff]
    %v738 = vld [vmem:[%s2 + $0x668] sm:$0xff]
    %v739 = vld [vmem:[%s2 + $0x670] sm:$0xff]
    %v740 = vld [vmem:[%s2 + $0x678] sm:$0xff]
    %v741 = vld [vmem:[%s2 + $0x680] sm:$0xff]
    %v742 = vld [vmem:[%s2 + $0x688] sm:$0xff]
    %v743 = vld [vmem:[%s2 + $0x690] sm:$0xff]
    %v744 = vld [vmem:[%s2 + $0x698] sm:$0xff]
    %v745 = vld [vmem:[%s2 + $0x6a0] sm:$0xff]
    %v746 = vld [vmem:[%s2 + $0x6a8] sm:$0xff]
    %v747 = vld [vmem:[%s2 + $0x6b0] sm:$0xff]
    %v748 = vld [vmem:[%s2 + $0x6b8] sm:$0xff]
    %v749 = vld [vmem:[%s2 + $0x6c0] sm:$0xff]
    %v750 = vld [vmem:[%s2 + $0x6c8] sm:$0xff]
    %v751 = vld [vmem:[%s2 + $0x6d0] sm:$0xff]
    %v752 = vld [vmem:[%s2 + $0x6d8] sm:$0xff]
    %v753 = vld [vmem:[%s2 + $0x6e0] sm:$0xff]
    %v754 = vld [vmem:[%s2 + $0x6e8] sm:$0xff]
    %v755 = vld [vmem:[%s2 + $0x6f0] sm:$0xff]
    %v756 = vld [vmem:[%s2 + $0x6f8] sm:$0xff]
    %v757 = vld [vmem:[%s2 + $0x700] sm:$0xff]
    %v758 = vld [vmem:[%s2 + $0x708] sm:$0xff]
    %v759 = vld [vmem:[%s2 + $0x710] sm:$0xff]
    %v760 = vld [vmem:[%s2 + $0x718] sm:$0xff]
    %v761 = vld [vmem:[%s2 + $0x720] sm:$0xff]
    %v762 = vld [vmem:[%s2 + $0x728] sm:$0xff]
    %v763 = vld [vmem:[%s2 + $0x730] sm:$0xff]
    %v764 = vld [vmem:[%s2 + $0x738] sm:$0xff]
    %v765 = vld [vmem:[%s2 + $0x740] sm:$0xff]
    %v766 = vld [vmem:[%s2 + $0x748] sm:$0xff]
    %v767 = vld [vmem:[%s2 + $0x750] sm:$0xff]
    %v768 = vld [vmem:[%s2 + $0x758] sm:$0xff]
    %v769 = vld [vmem:[%s2 + $0x760] sm:$0xff]
    %v770 = vld [vmem:[%s2 + $0x768] sm:$0xff]
    %v771 = vld [vmem:[%s2 + $0x770] sm:$0xff]
    %v772 = vld [vmem:[%s2 + $0x778] sm:$0xff]
    %v773 = vpack.c.bf16 %v535, %v533
    %v774 = vpack.c.bf16 %v536, %v534
    %v775 = vpack.c.bf16 %v539, %v537
    %v776 = vpack.c.bf16 %v540, %v538
    %v777 = vpack.c.bf16 %v543, %v541
    %v778 = vpack.c.bf16 %v544, %v542
    %v779 = vpack.c.bf16 %v547, %v545
    %v780 = vpack.c.bf16 %v548, %v546
    %v781 = vpack.c.bf16 %v551, %v549
    %v782 = vpack.c.bf16 %v552, %v550
    %v783 = vpack.c.bf16 %v555, %v553
    %v784 = vpack.c.bf16 %v556, %v554
    %v785 = vpack.c.bf16 %v559, %v557
    %v786 = vpack.c.bf16 %v560, %v558
    %v787 = vpack.c.bf16 %v563, %v561
    %v788 = vpack.c.bf16 %v564, %v562
    %v789 = vpack.c.bf16 %v567, %v565
    %v790 = vpack.c.bf16 %v568, %v566
    %v791 = vpack.c.bf16 %v571, %v569
    %v792 = vpack.c.bf16 %v572, %v570
    %v793 = vpack.c.bf16 %v575, %v573
    %v794 = vpack.c.bf16 %v576, %v574
    %v795 = vpack.c.bf16 %v579, %v577
    %v796 = vpack.c.bf16 %v580, %v578
    %v797 = vpack.c.bf16 %v583, %v581
    %v798 = vpack.c.bf16 %v584, %v582
    %v799 = vpack.c.bf16 %v587, %v585
    %v800 = vpack.c.bf16 %v588, %v586
    %v801 = vpack.c.bf16 %v591, %v589
    %v802 = vpack.c.bf16 %v592, %v590
    %v803 = vpack.c.bf16 %v595, %v593
    %v804 = vpack.c.bf16 %v596, %v594
    %v805 = vpack.c.bf16 %v599, %v597
    %v806 = vpack.c.bf16 %v600, %v598
    %v807 = vpack.c.bf16 %v603, %v601
    %v808 = vpack.c.bf16 %v604, %v602
    %v809 = vpack.c.bf16 %v607, %v605
    %v810 = vpack.c.bf16 %v608, %v606
    %v811 = vpack.c.bf16 %v611, %v609
    %v812 = vpack.c.bf16 %v612, %v610
    %v813 = vpack.c.bf16 %v615, %v613
    %v814 = vpack.c.bf16 %v616, %v614
    %v815 = vpack.c.bf16 %v619, %v617
    %v816 = vpack.c.bf16 %v620, %v618
    %v817 = vpack.c.bf16 %v623, %v621
    %v818 = vpack.c.bf16 %v624, %v622
    %v819 = vpack.c.bf16 %v627, %v625
    %v820 = vpack.c.bf16 %v628, %v626
    %v821 = vpack.c.bf16 %v631, %v629
    %v822 = vpack.c.bf16 %v632, %v630
    %v823 = vpack.c.bf16 %v635, %v633
    %v824 = vpack.c.bf16 %v636, %v634
    %v825 = vpack.c.bf16 %v639, %v637
    %v826 = vpack.c.bf16 %v640, %v638
    %v827 = vpack.c.bf16 %v643, %v641
    %v828 = vpack.c.bf16 %v644, %v642
    %v829 = vpack.c.bf16 %v647, %v645
    %v830 = vpack.c.bf16 %v648, %v646
    %v831 = vpack.c.bf16 %v651, %v649
    %v832 = vpack.c.bf16 %v652, %v650
    %v833 = vpack.c.bf16 %v655, %v653
    %v834 = vpack.c.bf16 %v656, %v654
    %v835 = vpack.c.bf16 %v659, %v657
    %v836 = vpack.c.bf16 %v660, %v658
    %v837 = vpack.c.bf16 %v663, %v661
    %v838 = vpack.c.bf16 %v664, %v662
    %v839 = vpack.c.bf16 %v667, %v665
    %v840 = vpack.c.bf16 %v668, %v666
    %v841 = vpack.c.bf16 %v671, %v669
    %v842 = vpack.c.bf16 %v672, %v670
    %v843 = vpack.c.bf16 %v675, %v673
    %v844 = vpack.c.bf16 %v676, %v674
    %v845 = vpack.c.bf16 %v679, %v677
    %v846 = vpack.c.bf16 %v680, %v678
    %v847 = vpack.c.bf16 %v683, %v681
    %v848 = vpack.c.bf16 %v684, %v682
    %v849 = vpack.c.bf16 %v687, %v685
    %v850 = vpack.c.bf16 %v688, %v686
    %v851 = vpack.c.bf16 %v691, %v689
    %v852 = vpack.c.bf16 %v692, %v690
    %v853 = vpack.c.bf16 %v695, %v693
    %v854 = vpack.c.bf16 %v696, %v694
    %v855 = vpack.c.bf16 %v699, %v697
    %v856 = vpack.c.bf16 %v700, %v698
    %v857 = vpack.c.bf16 %v703, %v701
    %v858 = vpack.c.bf16 %v704, %v702
    %v859 = vpack.c.bf16 %v707, %v705
    %v860 = vpack.c.bf16 %v708, %v706
    %v861 = vpack.c.bf16 %v711, %v709
    %v862 = vpack.c.bf16 %v712, %v710
    %v863 = vpack.c.bf16 %v715, %v713
    %v864 = vpack.c.bf16 %v716, %v714
    %v865 = vpack.c.bf16 %v719, %v717
    %v866 = vpack.c.bf16 %v720, %v718
    %v867 = vpack.c.bf16 %v723, %v721
    %v868 = vpack.c.bf16 %v724, %v722
    %v869 = vpack.c.bf16 %v727, %v725
    %v870 = vpack.c.bf16 %v728, %v726
    %v871 = vpack.c.bf16 %v731, %v729
    %v872 = vpack.c.bf16 %v732, %v730
    %v873 = vpack.c.bf16 %v735, %v733
    %v874 = vpack.c.bf16 %v736, %v734
    %v875 = vpack.c.bf16 %v739, %v737
    %v876 = vpack.c.bf16 %v740, %v738
    %v877 = vpack.c.bf16 %v743, %v741
    %v878 = vpack.c.bf16 %v744, %v742
    %v879 = vpack.c.bf16 %v747, %v745
    %v880 = vpack.c.bf16 %v748, %v746
    %v881 = vpack.c.bf16 %v751, %v749
    %v882 = vpack.c.bf16 %v752, %v750
    %v883 = vpack.c.bf16 %v755, %v753
    %v884 = vpack.c.bf16 %v756, %v754
    %v885 = vpack.c.bf16 %v759, %v757
    %v886 = vpack.c.bf16 %v760, %v758
    %v887 = vpack.c.bf16 %v763, %v761
    %v888 = vpack.c.bf16 %v764, %v762
    %v889 = vpack.c.bf16 %v767, %v765
    %v890 = vpack.c.bf16 %v768, %v766
    %v891 = vpack.c.bf16 %v771, %v769
    %v892 = vpack.c.bf16 %v772, %v770
    %vm893 = vcmask 523264
    %v895 = vsel %vm893, %v460, 0
    %v898 = vsel %vm893, %v468, 0
    %v901 = vsel %vm893, %v476, 0
    %v904 = vsel %vm893, %v484, 0
    %v907 = vsel %vm893, %v492, 0
    %v910 = vsel %vm893, %v500, 0
    %v913 = vsel %vm893, %v508, 0
    %v916 = vsel %vm893, %v516, 0
    %v919 = vsel %vm893, %v524, 0
    %v922 = vsel %vm893, %v532, 0
    %924 = vmatpush.bf16.msra.mxu0 %v787
    %925 = vmatpush.bf16.msra.mxu0 %v785
    %926 = vmatpush.bf16.msra.mxu0 %v783
    %927 = vmatpush.bf16.msra.mxu0 %v781
    %928 = vmatpush.bf16.msra.mxu0 %v779
    %929 = vmatpush.bf16.msra.mxu0 %v777
    %930 = vmatpush.bf16.msra.mxu0 %v775
    %931 = vmatpush.bf16.msra.mxu0 %v773
    %932 = vmatmul.bf16.gmra.mxu0 %v453
    %v933 = vpop.f32.mrf.mxu0
    %v934 = vadd.f32 0.0, %v933
    %v935 = vpop.f32.mrf.mxu0
    %v936 = vadd.f32 0.0, %v935
    %937 = vmatmul.bf16.gmra.mxu0 %v461
    %v938 = vpop.f32.mrf.mxu0
    %v939 = vadd.f32 0.0, %v938
    %v940 = vpop.f32.mrf.mxu0
    %v941 = vadd.f32 0.0, %v940
    %942 = vmatmul.bf16.gmra.mxu0 %v469
    %v943 = vpop.f32.mrf.mxu0
    %v944 = vadd.f32 0.0, %v943
    %v945 = vpop.f32.mrf.mxu0
    %v946 = vadd.f32 0.0, %v945
    %947 = vmatmul.bf16.gmra.mxu0 %v477
    %v948 = vpop.f32.mrf.mxu0
    %v949 = vadd.f32 0.0, %v948
    %v950 = vpop.f32.mrf.mxu0
    %v951 = vadd.f32 0.0, %v950
    %952 = vmatmul.bf16.gmra.mxu0 %v485
    %v953 = vpop.f32.mrf.mxu0
    %v954 = vadd.f32 0.0, %v953
    %v955 = vpop.f32.mrf.mxu0
    %v956 = vadd.f32 0.0, %v955
    %957 = vmatmul.bf16.gmra.mxu0 %v493
    %v958 = vpop.f32.mrf.mxu0
    %v959 = vadd.f32 0.0, %v958
    %v960 = vpop.f32.mrf.mxu0
    %v961 = vadd.f32 0.0, %v960
    %962 = vmatmul.bf16.gmra.mxu0 %v501
    %v963 = vpop.f32.mrf.mxu0
    %v964 = vadd.f32 0.0, %v963
    %v965 = vpop.f32.mrf.mxu0
    %v966 = vadd.f32 0.0, %v965
    %967 = vmatmul.bf16.gmra.mxu0 %v509
    %v968 = vpop.f32.mrf.mxu0
    %v969 = vadd.f32 0.0, %v968
    %v970 = vpop.f32.mrf.mxu0
    %v971 = vadd.f32 0.0, %v970
    %972 = vmatmul.bf16.gmra.mxu0 %v517
    %v973 = vpop.f32.mrf.mxu0
    %v974 = vadd.f32 0.0, %v973
    %v975 = vpop.f32.mrf.mxu0
    %v976 = vadd.f32 0.0, %v975
    %977 = vmatmul.bf16.gmra.mxu0 %v525
    %v978 = vpop.f32.mrf.mxu0
    %v979 = vadd.f32 0.0, %v978
    %v980 = vpop.f32.mrf.mxu0
    %v981 = vadd.f32 0.0, %v980
    %982 = vdwg.mxu0
    %983 = vmatpush.bf16.msra.mxu0 %v803
    %984 = vmatpush.bf16.msra.mxu0 %v801
    %985 = vmatpush.bf16.msra.mxu0 %v799
    %986 = vmatpush.bf16.msra.mxu0 %v797
    %987 = vmatpush.bf16.msra.mxu0 %v795
    %988 = vmatpush.bf16.msra.mxu0 %v793
    %989 = vmatpush.bf16.msra.mxu0 %v791
    %990 = vmatpush.bf16.msra.mxu0 %v789
    %991 = vmatmul.bf16.gmra.mxu0 %v454
    %v992 = vpop.f32.mrf.mxu0
    %v993 = vadd.f32 %v934, %v992
    %v994 = vpop.f32.mrf.mxu0
    %v995 = vadd.f32 %v936, %v994
    %996 = vmatmul.bf16.gmra.mxu0 %v462
    %v997 = vpop.f32.mrf.mxu0
    %v998 = vadd.f32 %v939, %v997
    %v999 = vpop.f32.mrf.mxu0
    %v1000 = vadd.f32 %v941, %v999
    %1001 = vmatmul.bf16.gmra.mxu0 %v470
    %v1002 = vpop.f32.mrf.mxu0
    %v1003 = vadd.f32 %v944, %v1002
    %v1004 = vpop.f32.mrf.mxu0
    %v1005 = vadd.f32 %v946, %v1004
    %1006 = vmatmul.bf16.gmra.mxu0 %v478
    %v1007 = vpop.f32.mrf.mxu0
    %v1008 = vadd.f32 %v949, %v1007
    %v1009 = vpop.f32.mrf.mxu0
    %v1010 = vadd.f32 %v951, %v1009
    %1011 = vmatmul.bf16.gmra.mxu0 %v486
    %v1012 = vpop.f32.mrf.mxu0
    %v1013 = vadd.f32 %v954, %v1012
    %v1014 = vpop.f32.mrf.mxu0
    %v1015 = vadd.f32 %v956, %v1014
    %1016 = vmatmul.bf16.gmra.mxu0 %v494
    %v1017 = vpop.f32.mrf.mxu0
    %v1018 = vadd.f32 %v959, %v1017
    %v1019 = vpop.f32.mrf.mxu0
    %v1020 = vadd.f32 %v961, %v1019
    %1021 = vmatmul.bf16.gmra.mxu0 %v502
    %v1022 = vpop.f32.mrf.mxu0
    %v1023 = vadd.f32 %v964, %v1022
    %v1024 = vpop.f32.mrf.mxu0
    %v1025 = vadd.f32 %v966, %v1024
    %1026 = vmatmul.bf16.gmra.mxu0 %v510
    %v1027 = vpop.f32.mrf.mxu0
    %v1028 = vadd.f32 %v969, %v1027
    %v1029 = vpop.f32.mrf.mxu0
    %v1030 = vadd.f32 %v971, %v1029
    %1031 = vmatmul.bf16.gmra.mxu0 %v518
    %v1032 = vpop.f32.mrf.mxu0
    %v1033 = vadd.f32 %v974, %v1032
    %v1034 = vpop.f32.mrf.mxu0
    %v1035 = vadd.f32 %v976, %v1034
    %1036 = vmatmul.bf16.gmra.mxu0 %v526
    %v1037 = vpop.f32.mrf.mxu0
    %v1038 = vadd.f32 %v979, %v1037
    %v1039 = vpop.f32.mrf.mxu0
    %v1040 = vadd.f32 %v981, %v1039
    %1041 = vdwg.mxu0
    %1042 = vmatpush.bf16.msra.mxu0 %v819
    %1043 = vmatpush.bf16.msra.mxu0 %v817
    %1044 = vmatpush.bf16.msra.mxu0 %v815
    %1045 = vmatpush.bf16.msra.mxu0 %v813
    %1046 = vmatpush.bf16.msra.mxu0 %v811
    %1047 = vmatpush.bf16.msra.mxu0 %v809
    %1048 = vmatpush.bf16.msra.mxu0 %v807
    %1049 = vmatpush.bf16.msra.mxu0 %v805
    %1050 = vmatmul.bf16.gmra.mxu0 %v455
    %v1051 = vpop.f32.mrf.mxu0
    %v1052 = vadd.f32 %v993, %v1051
    %v1053 = vpop.f32.mrf.mxu0
    %v1054 = vadd.f32 %v995, %v1053
    %1055 = vmatmul.bf16.gmra.mxu0 %v463
    %v1056 = vpop.f32.mrf.mxu0
    %v1057 = vadd.f32 %v998, %v1056
    %v1058 = vpop.f32.mrf.mxu0
    %v1059 = vadd.f32 %v1000, %v1058
    %1060 = vmatmul.bf16.gmra.mxu0 %v471
    %v1061 = vpop.f32.mrf.mxu0
    %v1062 = vadd.f32 %v1003, %v1061
    %v1063 = vpop.f32.mrf.mxu0
    %v1064 = vadd.f32 %v1005, %v1063
    %1065 = vmatmul.bf16.gmra.mxu0 %v479
    %v1066 = vpop.f32.mrf.mxu0
    %v1067 = vadd.f32 %v1008, %v1066
    %v1068 = vpop.f32.mrf.mxu0
    %v1069 = vadd.f32 %v1010, %v1068
    %1070 = vmatmul.bf16.gmra.mxu0 %v487
    %v1071 = vpop.f32.mrf.mxu0
    %v1072 = vadd.f32 %v1013, %v1071
    %v1073 = vpop.f32.mrf.mxu0
    %v1074 = vadd.f32 %v1015, %v1073
    %1075 = vmatmul.bf16.gmra.mxu0 %v495
    %v1076 = vpop.f32.mrf.mxu0
    %v1077 = vadd.f32 %v1018, %v1076
    %v1078 = vpop.f32.mrf.mxu0
    %v1079 = vadd.f32 %v1020, %v1078
    %1080 = vmatmul.bf16.gmra.mxu0 %v503
    %v1081 = vpop.f32.mrf.mxu0
    %v1082 = vadd.f32 %v1023, %v1081
    %v1083 = vpop.f32.mrf.mxu0
    %v1084 = vadd.f32 %v1025, %v1083
    %1085 = vmatmul.bf16.gmra.mxu0 %v511
    %v1086 = vpop.f32.mrf.mxu0
    %v1087 = vadd.f32 %v1028, %v1086
    %v1088 = vpop.f32.mrf.mxu0
    %v1089 = vadd.f32 %v1030, %v1088
    %1090 = vmatmul.bf16.gmra.mxu0 %v519
    %v1091 = vpop.f32.mrf.mxu0
    %v1092 = vadd.f32 %v1033, %v1091
    %v1093 = vpop.f32.mrf.mxu0
    %v1094 = vadd.f32 %v1035, %v1093
    %1095 = vmatmul.bf16.gmra.mxu0 %v527
    %v1096 = vpop.f32.mrf.mxu0
    %v1097 = vadd.f32 %v1038, %v1096
    %v1098 = vpop.f32.mrf.mxu0
    %v1099 = vadd.f32 %v1040, %v1098
    %1100 = vdwg.mxu0
    %1101 = vmatpush.bf16.msra.mxu0 %v835
    %1102 = vmatpush.bf16.msra.mxu0 %v833
    %1103 = vmatpush.bf16.msra.mxu0 %v831
    %1104 = vmatpush.bf16.msra.mxu0 %v829
    %1105 = vmatpush.bf16.msra.mxu0 %v827
    %1106 = vmatpush.bf16.msra.mxu0 %v825
    %1107 = vmatpush.bf16.msra.mxu0 %v823
    %1108 = vmatpush.bf16.msra.mxu0 %v821
    %1109 = vmatmul.bf16.gmra.mxu0 %v456
    %v1110 = vpop.f32.mrf.mxu0
    %v1111 = vadd.f32 %v1052, %v1110
    %v1112 = vpop.f32.mrf.mxu0
    %v1113 = vadd.f32 %v1054, %v1112
    %1114 = vmatmul.bf16.gmra.mxu0 %v464
    %v1115 = vpop.f32.mrf.mxu0
    %v1116 = vadd.f32 %v1057, %v1115
    %v1117 = vpop.f32.mrf.mxu0
    %v1118 = vadd.f32 %v1059, %v1117
    %1119 = vmatmul.bf16.gmra.mxu0 %v472
    %v1120 = vpop.f32.mrf.mxu0
    %v1121 = vadd.f32 %v1062, %v1120
    %v1122 = vpop.f32.mrf.mxu0
    %v1123 = vadd.f32 %v1064, %v1122
    %1124 = vmatmul.bf16.gmra.mxu0 %v480
    %v1125 = vpop.f32.mrf.mxu0
    %v1126 = vadd.f32 %v1067, %v1125
    %v1127 = vpop.f32.mrf.mxu0
    %v1128 = vadd.f32 %v1069, %v1127
    %1129 = vmatmul.bf16.gmra.mxu0 %v488
    %v1130 = vpop.f32.mrf.mxu0
    %v1131 = vadd.f32 %v1072, %v1130
    %v1132 = vpop.f32.mrf.mxu0
    %v1133 = vadd.f32 %v1074, %v1132
    %1134 = vmatmul.bf16.gmra.mxu0 %v496
    %v1135 = vpop.f32.mrf.mxu0
    %v1136 = vadd.f32 %v1077, %v1135
    %v1137 = vpop.f32.mrf.mxu0
    %v1138 = vadd.f32 %v1079, %v1137
    %1139 = vmatmul.bf16.gmra.mxu0 %v504
    %v1140 = vpop.f32.mrf.mxu0
    %v1141 = vadd.f32 %v1082, %v1140
    %v1142 = vpop.f32.mrf.mxu0
    %v1143 = vadd.f32 %v1084, %v1142
    %1144 = vmatmul.bf16.gmra.mxu0 %v512
    %v1145 = vpop.f32.mrf.mxu0
    %v1146 = vadd.f32 %v1087, %v1145
    %v1147 = vpop.f32.mrf.mxu0
    %v1148 = vadd.f32 %v1089, %v1147
    %1149 = vmatmul.bf16.gmra.mxu0 %v520
    %v1150 = vpop.f32.mrf.mxu0
    %v1151 = vadd.f32 %v1092, %v1150
    %v1152 = vpop.f32.mrf.mxu0
    %v1153 = vadd.f32 %v1094, %v1152
    %1154 = vmatmul.bf16.gmra.mxu0 %v528
    %v1155 = vpop.f32.mrf.mxu0
    %v1156 = vadd.f32 %v1097, %v1155
    %v1157 = vpop.f32.mrf.mxu0
    %v1158 = vadd.f32 %v1099, %v1157
    %1159 = vdwg.mxu0
    %1160 = vmatpush.bf16.msra.mxu0 %v851
    %1161 = vmatpush.bf16.msra.mxu0 %v849
    %1162 = vmatpush.bf16.msra.mxu0 %v847
    %1163 = vmatpush.bf16.msra.mxu0 %v845
    %1164 = vmatpush.bf16.msra.mxu0 %v843
    %1165 = vmatpush.bf16.msra.mxu0 %v841
    %1166 = vmatpush.bf16.msra.mxu0 %v839
    %1167 = vmatpush.bf16.msra.mxu0 %v837
    %1168 = vmatmul.bf16.gmra.mxu0 %v457
    %v1169 = vpop.f32.mrf.mxu0
    %v1170 = vadd.f32 %v1111, %v1169
    %v1171 = vpop.f32.mrf.mxu0
    %v1172 = vadd.f32 %v1113, %v1171
    %1173 = vmatmul.bf16.gmra.mxu0 %v465
    %v1174 = vpop.f32.mrf.mxu0
    %v1175 = vadd.f32 %v1116, %v1174
    %v1176 = vpop.f32.mrf.mxu0
    %v1177 = vadd.f32 %v1118, %v1176
    %1178 = vmatmul.bf16.gmra.mxu0 %v473
    %v1179 = vpop.f32.mrf.mxu0
    %v1180 = vadd.f32 %v1121, %v1179
    %v1181 = vpop.f32.mrf.mxu0
    %v1182 = vadd.f32 %v1123, %v1181
    %1183 = vmatmul.bf16.gmra.mxu0 %v481
    %v1184 = vpop.f32.mrf.mxu0
    %v1185 = vadd.f32 %v1126, %v1184
    %v1186 = vpop.f32.mrf.mxu0
    %v1187 = vadd.f32 %v1128, %v1186
    %1188 = vmatmul.bf16.gmra.mxu0 %v489
    %v1189 = vpop.f32.mrf.mxu0
    %v1190 = vadd.f32 %v1131, %v1189
    %v1191 = vpop.f32.mrf.mxu0
    %v1192 = vadd.f32 %v1133, %v1191
    %1193 = vmatmul.bf16.gmra.mxu0 %v497
    %v1194 = vpop.f32.mrf.mxu0
    %v1195 = vadd.f32 %v1136, %v1194
    %v1196 = vpop.f32.mrf.mxu0
    %v1197 = vadd.f32 %v1138, %v1196
    %1198 = vmatmul.bf16.gmra.mxu0 %v505
    %v1199 = vpop.f32.mrf.mxu0
    %v1200 = vadd.f32 %v1141, %v1199
    %v1201 = vpop.f32.mrf.mxu0
    %v1202 = vadd.f32 %v1143, %v1201
    %1203 = vmatmul.bf16.gmra.mxu0 %v513
    %v1204 = vpop.f32.mrf.mxu0
    %v1205 = vadd.f32 %v1146, %v1204
    %v1206 = vpop.f32.mrf.mxu0
    %v1207 = vadd.f32 %v1148, %v1206
    %1208 = vmatmul.bf16.gmra.mxu0 %v521
    %v1209 = vpop.f32.mrf.mxu0
    %v1210 = vadd.f32 %v1151, %v1209
    %v1211 = vpop.f32.mrf.mxu0
    %v1212 = vadd.f32 %v1153, %v1211
    %1213 = vmatmul.bf16.gmra.mxu0 %v529
    %v1214 = vpop.f32.mrf.mxu0
    %v1215 = vadd.f32 %v1156, %v1214
    %v1216 = vpop.f32.mrf.mxu0
    %v1217 = vadd.f32 %v1158, %v1216
    %1218 = vdwg.mxu0
    %1219 = vmatpush.bf16.msra.mxu0 %v867
    %1220 = vmatpush.bf16.msra.mxu0 %v865
    %1221 = vmatpush.bf16.msra.mxu0 %v863
    %1222 = vmatpush.bf16.msra.mxu0 %v861
    %1223 = vmatpush.bf16.msra.mxu0 %v859
    %1224 = vmatpush.bf16.msra.mxu0 %v857
    %1225 = vmatpush.bf16.msra.mxu0 %v855
    %1226 = vmatpush.bf16.msra.mxu0 %v853
    %1227 = vmatmul.bf16.gmra.mxu0 %v458
    %v1228 = vpop.f32.mrf.mxu0
    %v1229 = vadd.f32 %v1170, %v1228
    %v1230 = vpop.f32.mrf.mxu0
    %v1231 = vadd.f32 %v1172, %v1230
    %1232 = vmatmul.bf16.gmra.mxu0 %v466
    %v1233 = vpop.f32.mrf.mxu0
    %v1234 = vadd.f32 %v1175, %v1233
    %v1235 = vpop.f32.mrf.mxu0
    %v1236 = vadd.f32 %v1177, %v1235
    %1237 = vmatmul.bf16.gmra.mxu0 %v474
    %v1238 = vpop.f32.mrf.mxu0
    %v1239 = vadd.f32 %v1180, %v1238
    %v1240 = vpop.f32.mrf.mxu0
    %v1241 = vadd.f32 %v1182, %v1240
    %1242 = vmatmul.bf16.gmra.mxu0 %v482
    %v1243 = vpop.f32.mrf.mxu0
    %v1244 = vadd.f32 %v1185, %v1243
    %v1245 = vpop.f32.mrf.mxu0
    %v1246 = vadd.f32 %v1187, %v1245
    %1247 = vmatmul.bf16.gmra.mxu0 %v490
    %v1248 = vpop.f32.mrf.mxu0
    %v1249 = vadd.f32 %v1190, %v1248
    %v1250 = vpop.f32.mrf.mxu0
    %v1251 = vadd.f32 %v1192, %v1250
    %1252 = vmatmul.bf16.gmra.mxu0 %v498
    %v1253 = vpop.f32.mrf.mxu0
    %v1254 = vadd.f32 %v1195, %v1253
    %v1255 = vpop.f32.mrf.mxu0
    %v1256 = vadd.f32 %v1197, %v1255
    %1257 = vmatmul.bf16.gmra.mxu0 %v506
    %v1258 = vpop.f32.mrf.mxu0
    %v1259 = vadd.f32 %v1200, %v1258
    %v1260 = vpop.f32.mrf.mxu0
    %v1261 = vadd.f32 %v1202, %v1260
    %1262 = vmatmul.bf16.gmra.mxu0 %v514
    %v1263 = vpop.f32.mrf.mxu0
    %v1264 = vadd.f32 %v1205, %v1263
    %v1265 = vpop.f32.mrf.mxu0
    %v1266 = vadd.f32 %v1207, %v1265
    %1267 = vmatmul.bf16.gmra.mxu0 %v522
    %v1268 = vpop.f32.mrf.mxu0
    %v1269 = vadd.f32 %v1210, %v1268
    %v1270 = vpop.f32.mrf.mxu0
    %v1271 = vadd.f32 %v1212, %v1270
    %1272 = vmatmul.bf16.gmra.mxu0 %v530
    %v1273 = vpop.f32.mrf.mxu0
    %v1274 = vadd.f32 %v1215, %v1273
    %v1275 = vpop.f32.mrf.mxu0
    %v1276 = vadd.f32 %v1217, %v1275
    %1277 = vdwg.mxu0
    %1278 = vmatpush.bf16.msra.mxu0 %v883
    %1279 = vmatpush.bf16.msra.mxu0 %v881
    %1280 = vmatpush.bf16.msra.mxu0 %v879
    %1281 = vmatpush.bf16.msra.mxu0 %v877
    %1282 = vmatpush.bf16.msra.mxu0 %v875
    %1283 = vmatpush.bf16.msra.mxu0 %v873
    %1284 = vmatpush.bf16.msra.mxu0 %v871
    %1285 = vmatpush.bf16.msra.mxu0 %v869
    %1286 = vmatmul.bf16.gmra.mxu0 %v459
    %v1287 = vpop.f32.mrf.mxu0
    %v1288 = vadd.f32 %v1229, %v1287
    %v1289 = vpop.f32.mrf.mxu0
    %v1290 = vadd.f32 %v1231, %v1289
    %1291 = vmatmul.bf16.gmra.mxu0 %v467
    %v1292 = vpop.f32.mrf.mxu0
    %v1293 = vadd.f32 %v1234, %v1292
    %v1294 = vpop.f32.mrf.mxu0
    %v1295 = vadd.f32 %v1236, %v1294
    %1296 = vmatmul.bf16.gmra.mxu0 %v475
    %v1297 = vpop.f32.mrf.mxu0
    %v1298 = vadd.f32 %v1239, %v1297
    %v1299 = vpop.f32.mrf.mxu0
    %v1300 = vadd.f32 %v1241, %v1299
    %1301 = vmatmul.bf16.gmra.mxu0 %v483
    %v1302 = vpop.f32.mrf.mxu0
    %v1303 = vadd.f32 %v1244, %v1302
    %v1304 = vpop.f32.mrf.mxu0
    %v1305 = vadd.f32 %v1246, %v1304
    %1306 = vmatmul.bf16.gmra.mxu0 %v491
    %v1307 = vpop.f32.mrf.mxu0
    %v1308 = vadd.f32 %v1249, %v1307
    %v1309 = vpop.f32.mrf.mxu0
    %v1310 = vadd.f32 %v1251, %v1309
    %1311 = vmatmul.bf16.gmra.mxu0 %v499
    %v1312 = vpop.f32.mrf.mxu0
    %v1313 = vadd.f32 %v1254, %v1312
    %v1314 = vpop.f32.mrf.mxu0
    %v1315 = vadd.f32 %v1256, %v1314
    %1316 = vmatmul.bf16.gmra.mxu0 %v507
    %v1317 = vpop.f32.mrf.mxu0
    %v1318 = vadd.f32 %v1259, %v1317
    %v1319 = vpop.f32.mrf.mxu0
    %v1320 = vadd.f32 %v1261, %v1319
    %1321 = vmatmul.bf16.gmra.mxu0 %v515
    %v1322 = vpop.f32.mrf.mxu0
    %v1323 = vadd.f32 %v1264, %v1322
    %v1324 = vpop.f32.mrf.mxu0
    %v1325 = vadd.f32 %v1266, %v1324
    %1326 = vmatmul.bf16.gmra.mxu0 %v523
    %v1327 = vpop.f32.mrf.mxu0
    %v1328 = vadd.f32 %v1269, %v1327
    %v1329 = vpop.f32.mrf.mxu0
    %v1330 = vadd.f32 %v1271, %v1329
    %1331 = vmatmul.bf16.gmra.mxu0 %v531
    %v1332 = vpop.f32.mrf.mxu0
    %v1333 = vadd.f32 %v1274, %v1332
    %v1334 = vpop.f32.mrf.mxu0
    %v1335 = vadd.f32 %v1276, %v1334
    %1336 = vdwg.mxu0
    %1337 = vmatpush.bf16.msra.mxu0 0
    %1338 = vmatpush.bf16.msra.mxu0 0
    %1339 = vmatpush.bf16.msra.mxu0 0
    %1340 = vmatpush.bf16.msra.mxu0 0
    %1341 = vmatpush.bf16.msra.mxu0 %v891
    %1342 = vmatpush.bf16.msra.mxu0 %v889
    %1343 = vmatpush.bf16.msra.mxu0 %v887
    %1344 = vmatpush.bf16.msra.mxu0 %v885
    %1345 = vmatmul.bf16.gmra.mxu0 %v895
    %v1346 = vpop.f32.mrf.mxu0
    %v1347 = vadd.f32 %v1288, %v1346
    %v1348 = vpop.f32.mrf.mxu0
    %v1349 = vadd.f32 %v1290, %v1348
    %1350 = vmatmul.bf16.gmra.mxu0 %v898
    %v1351 = vpop.f32.mrf.mxu0
    %v1352 = vadd.f32 %v1293, %v1351
    %v1353 = vpop.f32.mrf.mxu0
    %v1354 = vadd.f32 %v1295, %v1353
    %1355 = vmatmul.bf16.gmra.mxu0 %v901
    %v1356 = vpop.f32.mrf.mxu0
    %v1357 = vadd.f32 %v1298, %v1356
    %v1358 = vpop.f32.mrf.mxu0
    %v1359 = vadd.f32 %v1300, %v1358
    %1360 = vmatmul.bf16.gmra.mxu0 %v904
    %v1361 = vpop.f32.mrf.mxu0
    %v1362 = vadd.f32 %v1303, %v1361
    %v1363 = vpop.f32.mrf.mxu0
    %v1364 = vadd.f32 %v1305, %v1363
    %1365 = vmatmul.bf16.gmra.mxu0 %v907
    %v1366 = vpop.f32.mrf.mxu0
    %v1367 = vadd.f32 %v1308, %v1366
    %v1368 = vpop.f32.mrf.mxu0
    %v1369 = vadd.f32 %v1310, %v1368
    %1370 = vmatmul.bf16.gmra.mxu0 %v910
    %v1371 = vpop.f32.mrf.mxu0
    %v1372 = vadd.f32 %v1313, %v1371
    %v1373 = vpop.f32.mrf.mxu0
    %v1374 = vadd.f32 %v1315, %v1373
    %1375 = vmatmul.bf16.gmra.mxu0 %v913
    %v1376 = vpop.f32.mrf.mxu0
    %v1377 = vadd.f32 %v1318, %v1376
    %v1378 = vpop.f32.mrf.mxu0
    %v1379 = vadd.f32 %v1320, %v1378
    %1380 = vmatmul.bf16.gmra.mxu0 %v916
    %v1381 = vpop.f32.mrf.mxu0
    %v1382 = vadd.f32 %v1323, %v1381
    %v1383 = vpop.f32.mrf.mxu0
    %v1384 = vadd.f32 %v1325, %v1383
    %1385 = vmatmul.bf16.gmra.mxu0 %v919
    %v1386 = vpop.f32.mrf.mxu0
    %v1387 = vadd.f32 %v1328, %v1386
    %v1388 = vpop.f32.mrf.mxu0
    %v1389 = vadd.f32 %v1330, %v1388
    %1390 = vmatmul.bf16.gmra.mxu0 %v922
    %v1391 = vpop.f32.mrf.mxu0
    %v1392 = vadd.f32 %v1333, %v1391
    %v1393 = vpop.f32.mrf.mxu0
    %v1394 = vadd.f32 %v1335, %v1393
    %1395 = vdwg.mxu0
    %1396 = vmatpush.bf16.msra.mxu0 %v788
    %1397 = vmatpush.bf16.msra.mxu0 %v786
    %1398 = vmatpush.bf16.msra.mxu0 %v784
    %1399 = vmatpush.bf16.msra.mxu0 %v782
    %1400 = vmatpush.bf16.msra.mxu0 %v780
    %1401 = vmatpush.bf16.msra.mxu0 %v778
    %1402 = vmatpush.bf16.msra.mxu0 %v776
    %1403 = vmatpush.bf16.msra.mxu0 %v774
    %1404 = vmatmul.bf16.gmra.mxu0 %v453
    %v1405 = vpop.f32.mrf.mxu0
    %v1406 = vadd.f32 0.0, %v1405
    %v1407 = vpop.f32.mrf.mxu0
    %v1408 = vadd.f32 0.0, %v1407
    %1409 = vmatmul.bf16.gmra.mxu0 %v461
    %v1410 = vpop.f32.mrf.mxu0
    %v1411 = vadd.f32 0.0, %v1410
    %v1412 = vpop.f32.mrf.mxu0
    %v1413 = vadd.f32 0.0, %v1412
    %1414 = vmatmul.bf16.gmra.mxu0 %v469
    %v1415 = vpop.f32.mrf.mxu0
    %v1416 = vadd.f32 0.0, %v1415
    %v1417 = vpop.f32.mrf.mxu0
    %v1418 = vadd.f32 0.0, %v1417
    %1419 = vmatmul.bf16.gmra.mxu0 %v477
    %v1420 = vpop.f32.mrf.mxu0
    %v1421 = vadd.f32 0.0, %v1420
    %v1422 = vpop.f32.mrf.mxu0
    %v1423 = vadd.f32 0.0, %v1422
    %1424 = vmatmul.bf16.gmra.mxu0 %v485
    %v1425 = vpop.f32.mrf.mxu0
    %v1426 = vadd.f32 0.0, %v1425
    %v1427 = vpop.f32.mrf.mxu0
    %v1428 = vadd.f32 0.0, %v1427
    %1429 = vmatmul.bf16.gmra.mxu0 %v493
    %v1430 = vpop.f32.mrf.mxu0
    %v1431 = vadd.f32 0.0, %v1430
    %v1432 = vpop.f32.mrf.mxu0
    %v1433 = vadd.f32 0.0, %v1432
    %1434 = vmatmul.bf16.gmra.mxu0 %v501
    %v1435 = vpop.f32.mrf.mxu0
    %v1436 = vadd.f32 0.0, %v1435
    %v1437 = vpop.f32.mrf.mxu0
    %v1438 = vadd.f32 0.0, %v1437
    %1439 = vmatmul.bf16.gmra.mxu0 %v509
    %v1440 = vpop.f32.mrf.mxu0
    %v1441 = vadd.f32 0.0, %v1440
    %v1442 = vpop.f32.mrf.mxu0
    %v1443 = vadd.f32 0.0, %v1442
    %1444 = vmatmul.bf16.gmra.mxu0 %v517
    %v1445 = vpop.f32.mrf.mxu0
    %v1446 = vadd.f32 0.0, %v1445
    %v1447 = vpop.f32.mrf.mxu0
    %v1448 = vadd.f32 0.0, %v1447
    %1449 = vmatmul.bf16.gmra.mxu0 %v525
    %v1450 = vpop.f32.mrf.mxu0
    %v1451 = vadd.f32 0.0, %v1450
    %v1452 = vpop.f32.mrf.mxu0
    %v1453 = vadd.f32 0.0, %v1452
    %1454 = vdwg.mxu0
    %1455 = vmatpush.bf16.msra.mxu0 %v804
    %1456 = vmatpush.bf16.msra.mxu0 %v802
    %1457 = vmatpush.bf16.msra.mxu0 %v800
    %1458 = vmatpush.bf16.msra.mxu0 %v798
    %1459 = vmatpush.bf16.msra.mxu0 %v796
    %1460 = vmatpush.bf16.msra.mxu0 %v794
    %1461 = vmatpush.bf16.msra.mxu0 %v792
    %1462 = vmatpush.bf16.msra.mxu0 %v790
    %1463 = vmatmul.bf16.gmra.mxu0 %v454
    %v1464 = vpop.f32.mrf.mxu0
    %v1465 = vadd.f32 %v1406, %v1464
    %v1466 = vpop.f32.mrf.mxu0
    %v1467 = vadd.f32 %v1408, %v1466
    %1468 = vmatmul.bf16.gmra.mxu0 %v462
    %v1469 = vpop.f32.mrf.mxu0
    %v1470 = vadd.f32 %v1411, %v1469
    %v1471 = vpop.f32.mrf.mxu0
    %v1472 = vadd.f32 %v1413, %v1471
    %1473 = vmatmul.bf16.gmra.mxu0 %v470
    %v1474 = vpop.f32.mrf.mxu0
    %v1475 = vadd.f32 %v1416, %v1474
    %v1476 = vpop.f32.mrf.mxu0
    %v1477 = vadd.f32 %v1418, %v1476
    %1478 = vmatmul.bf16.gmra.mxu0 %v478
    %v1479 = vpop.f32.mrf.mxu0
    %v1480 = vadd.f32 %v1421, %v1479
    %v1481 = vpop.f32.mrf.mxu0
    %v1482 = vadd.f32 %v1423, %v1481
    %1483 = vmatmul.bf16.gmra.mxu0 %v486
    %v1484 = vpop.f32.mrf.mxu0
    %v1485 = vadd.f32 %v1426, %v1484
    %v1486 = vpop.f32.mrf.mxu0
    %v1487 = vadd.f32 %v1428, %v1486
    %1488 = vmatmul.bf16.gmra.mxu0 %v494
    %v1489 = vpop.f32.mrf.mxu0
    %v1490 = vadd.f32 %v1431, %v1489
    %v1491 = vpop.f32.mrf.mxu0
    %v1492 = vadd.f32 %v1433, %v1491
    %1493 = vmatmul.bf16.gmra.mxu0 %v502
    %v1494 = vpop.f32.mrf.mxu0
    %v1495 = vadd.f32 %v1436, %v1494
    %v1496 = vpop.f32.mrf.mxu0
    %v1497 = vadd.f32 %v1438, %v1496
    %1498 = vmatmul.bf16.gmra.mxu0 %v510
    %v1499 = vpop.f32.mrf.mxu0
    %v1500 = vadd.f32 %v1441, %v1499
    %v1501 = vpop.f32.mrf.mxu0
    %v1502 = vadd.f32 %v1443, %v1501
    %1503 = vmatmul.bf16.gmra.mxu0 %v518
    %v1504 = vpop.f32.mrf.mxu0
    %v1505 = vadd.f32 %v1446, %v1504
    %v1506 = vpop.f32.mrf.mxu0
    %v1507 = vadd.f32 %v1448, %v1506
    %1508 = vmatmul.bf16.gmra.mxu0 %v526
    %v1509 = vpop.f32.mrf.mxu0
    %v1510 = vadd.f32 %v1451, %v1509
    %v1511 = vpop.f32.mrf.mxu0
    %v1512 = vadd.f32 %v1453, %v1511
    %1513 = vdwg.mxu0
    %1514 = vmatpush.bf16.msra.mxu0 %v820
    %1515 = vmatpush.bf16.msra.mxu0 %v818
    %1516 = vmatpush.bf16.msra.mxu0 %v816
    %1517 = vmatpush.bf16.msra.mxu0 %v814
    %1518 = vmatpush.bf16.msra.mxu0 %v812
    %1519 = vmatpush.bf16.msra.mxu0 %v810
    %1520 = vmatpush.bf16.msra.mxu0 %v808
    %1521 = vmatpush.bf16.msra.mxu0 %v806
    %1522 = vmatmul.bf16.gmra.mxu0 %v455
    %v1523 = vpop.f32.mrf.mxu0
    %v1524 = vadd.f32 %v1465, %v1523
    %v1525 = vpop.f32.mrf.mxu0
    %v1526 = vadd.f32 %v1467, %v1525
    %1527 = vmatmul.bf16.gmra.mxu0 %v463
    %v1528 = vpop.f32.mrf.mxu0
    %v1529 = vadd.f32 %v1470, %v1528
    %v1530 = vpop.f32.mrf.mxu0
    %v1531 = vadd.f32 %v1472, %v1530
    %1532 = vmatmul.bf16.gmra.mxu0 %v471
    %v1533 = vpop.f32.mrf.mxu0
    %v1534 = vadd.f32 %v1475, %v1533
    %v1535 = vpop.f32.mrf.mxu0
    %v1536 = vadd.f32 %v1477, %v1535
    %1537 = vmatmul.bf16.gmra.mxu0 %v479
    %v1538 = vpop.f32.mrf.mxu0
    %v1539 = vadd.f32 %v1480, %v1538
    %v1540 = vpop.f32.mrf.mxu0
    %v1541 = vadd.f32 %v1482, %v1540
    %1542 = vmatmul.bf16.gmra.mxu0 %v487
    %v1543 = vpop.f32.mrf.mxu0
    %v1544 = vadd.f32 %v1485, %v1543
    %v1545 = vpop.f32.mrf.mxu0
    %v1546 = vadd.f32 %v1487, %v1545
    %1547 = vmatmul.bf16.gmra.mxu0 %v495
    %v1548 = vpop.f32.mrf.mxu0
    %v1549 = vadd.f32 %v1490, %v1548
    %v1550 = vpop.f32.mrf.mxu0
    %v1551 = vadd.f32 %v1492, %v1550
    %1552 = vmatmul.bf16.gmra.mxu0 %v503
    %v1553 = vpop.f32.mrf.mxu0
    %v1554 = vadd.f32 %v1495, %v1553
    %v1555 = vpop.f32.mrf.mxu0
    %v1556 = vadd.f32 %v1497, %v1555
    %1557 = vmatmul.bf16.gmra.mxu0 %v511
    %v1558 = vpop.f32.mrf.mxu0
    %v1559 = vadd.f32 %v1500, %v1558
    %v1560 = vpop.f32.mrf.mxu0
    %v1561 = vadd.f32 %v1502, %v1560
    %1562 = vmatmul.bf16.gmra.mxu0 %v519
    %v1563 = vpop.f32.mrf.mxu0
    %v1564 = vadd.f32 %v1505, %v1563
    %v1565 = vpop.f32.mrf.mxu0
    %v1566 = vadd.f32 %v1507, %v1565
    %1567 = vmatmul.bf16.gmra.mxu0 %v527
    %v1568 = vpop.f32.mrf.mxu0
    %v1569 = vadd.f32 %v1510, %v1568
    %v1570 = vpop.f32.mrf.mxu0
    %v1571 = vadd.f32 %v1512, %v1570
    %1572 = vdwg.mxu0
    %1573 = vmatpush.bf16.msra.mxu0 %v836
    %1574 = vmatpush.bf16.msra.mxu0 %v834
    %1575 = vmatpush.bf16.msra.mxu0 %v832
    %1576 = vmatpush.bf16.msra.mxu0 %v830
    %1577 = vmatpush.bf16.msra.mxu0 %v828
    %1578 = vmatpush.bf16.msra.mxu0 %v826
    %1579 = vmatpush.bf16.msra.mxu0 %v824
    %1580 = vmatpush.bf16.msra.mxu0 %v822
    %1581 = vmatmul.bf16.gmra.mxu0 %v456
    %v1582 = vpop.f32.mrf.mxu0
    %v1583 = vadd.f32 %v1524, %v1582
    %v1584 = vpop.f32.mrf.mxu0
    %v1585 = vadd.f32 %v1526, %v1584
    %1586 = vmatmul.bf16.gmra.mxu0 %v464
    %v1587 = vpop.f32.mrf.mxu0
    %v1588 = vadd.f32 %v1529, %v1587
    %v1589 = vpop.f32.mrf.mxu0
    %v1590 = vadd.f32 %v1531, %v1589
    %1591 = vmatmul.bf16.gmra.mxu0 %v472
    %v1592 = vpop.f32.mrf.mxu0
    %v1593 = vadd.f32 %v1534, %v1592
    %v1594 = vpop.f32.mrf.mxu0
    %v1595 = vadd.f32 %v1536, %v1594
    %1596 = vmatmul.bf16.gmra.mxu0 %v480
    %v1597 = vpop.f32.mrf.mxu0
    %v1598 = vadd.f32 %v1539, %v1597
    %v1599 = vpop.f32.mrf.mxu0
    %v1600 = vadd.f32 %v1541, %v1599
    %1601 = vmatmul.bf16.gmra.mxu0 %v488
    %v1602 = vpop.f32.mrf.mxu0
    %v1603 = vadd.f32 %v1544, %v1602
    %v1604 = vpop.f32.mrf.mxu0
    %v1605 = vadd.f32 %v1546, %v1604
    %1606 = vmatmul.bf16.gmra.mxu0 %v496
    %v1607 = vpop.f32.mrf.mxu0
    %v1608 = vadd.f32 %v1549, %v1607
    %v1609 = vpop.f32.mrf.mxu0
    %v1610 = vadd.f32 %v1551, %v1609
    %1611 = vmatmul.bf16.gmra.mxu0 %v504
    %v1612 = vpop.f32.mrf.mxu0
    %v1613 = vadd.f32 %v1554, %v1612
    %v1614 = vpop.f32.mrf.mxu0
    %v1615 = vadd.f32 %v1556, %v1614
    %1616 = vmatmul.bf16.gmra.mxu0 %v512
    %v1617 = vpop.f32.mrf.mxu0
    %v1618 = vadd.f32 %v1559, %v1617
    %v1619 = vpop.f32.mrf.mxu0
    %v1620 = vadd.f32 %v1561, %v1619
    %1621 = vmatmul.bf16.gmra.mxu0 %v520
    %v1622 = vpop.f32.mrf.mxu0
    %v1623 = vadd.f32 %v1564, %v1622
    %v1624 = vpop.f32.mrf.mxu0
    %v1625 = vadd.f32 %v1566, %v1624
    %1626 = vmatmul.bf16.gmra.mxu0 %v528
    %v1627 = vpop.f32.mrf.mxu0
    %v1628 = vadd.f32 %v1569, %v1627
    %v1629 = vpop.f32.mrf.mxu0
    %v1630 = vadd.f32 %v1571, %v1629
    %1631 = vdwg.mxu0
    %1632 = vmatpush.bf16.msra.mxu0 %v852
    %1633 = vmatpush.bf16.msra.mxu0 %v850
    %1634 = vmatpush.bf16.msra.mxu0 %v848
    %1635 = vmatpush.bf16.msra.mxu0 %v846
    %1636 = vmatpush.bf16.msra.mxu0 %v844
    %1637 = vmatpush.bf16.msra.mxu0 %v842
    %1638 = vmatpush.bf16.msra.mxu0 %v840
    %1639 = vmatpush.bf16.msra.mxu0 %v838
    %1640 = vmatmul.bf16.gmra.mxu0 %v457
    %v1641 = vpop.f32.mrf.mxu0
    %v1642 = vadd.f32 %v1583, %v1641
    %v1643 = vpop.f32.mrf.mxu0
    %v1644 = vadd.f32 %v1585, %v1643
    %1645 = vmatmul.bf16.gmra.mxu0 %v465
    %v1646 = vpop.f32.mrf.mxu0
    %v1647 = vadd.f32 %v1588, %v1646
    %v1648 = vpop.f32.mrf.mxu0
    %v1649 = vadd.f32 %v1590, %v1648
    %1650 = vmatmul.bf16.gmra.mxu0 %v473
    %v1651 = vpop.f32.mrf.mxu0
    %v1652 = vadd.f32 %v1593, %v1651
    %v1653 = vpop.f32.mrf.mxu0
    %v1654 = vadd.f32 %v1595, %v1653
    %1655 = vmatmul.bf16.gmra.mxu0 %v481
    %v1656 = vpop.f32.mrf.mxu0
    %v1657 = vadd.f32 %v1598, %v1656
    %v1658 = vpop.f32.mrf.mxu0
    %v1659 = vadd.f32 %v1600, %v1658
    %1660 = vmatmul.bf16.gmra.mxu0 %v489
    %v1661 = vpop.f32.mrf.mxu0
    %v1662 = vadd.f32 %v1603, %v1661
    %v1663 = vpop.f32.mrf.mxu0
    %v1664 = vadd.f32 %v1605, %v1663
    %1665 = vmatmul.bf16.gmra.mxu0 %v497
    %v1666 = vpop.f32.mrf.mxu0
    %v1667 = vadd.f32 %v1608, %v1666
    %v1668 = vpop.f32.mrf.mxu0
    %v1669 = vadd.f32 %v1610, %v1668
    %1670 = vmatmul.bf16.gmra.mxu0 %v505
    %v1671 = vpop.f32.mrf.mxu0
    %v1672 = vadd.f32 %v1613, %v1671
    %v1673 = vpop.f32.mrf.mxu0
    %v1674 = vadd.f32 %v1615, %v1673
    %1675 = vmatmul.bf16.gmra.mxu0 %v513
    %v1676 = vpop.f32.mrf.mxu0
    %v1677 = vadd.f32 %v1618, %v1676
    %v1678 = vpop.f32.mrf.mxu0
    %v1679 = vadd.f32 %v1620, %v1678
    %1680 = vmatmul.bf16.gmra.mxu0 %v521
    %v1681 = vpop.f32.mrf.mxu0
    %v1682 = vadd.f32 %v1623, %v1681
    %v1683 = vpop.f32.mrf.mxu0
    %v1684 = vadd.f32 %v1625, %v1683
    %1685 = vmatmul.bf16.gmra.mxu0 %v529
    %v1686 = vpop.f32.mrf.mxu0
    %v1687 = vadd.f32 %v1628, %v1686
    %v1688 = vpop.f32.mrf.mxu0
    %v1689 = vadd.f32 %v1630, %v1688
    %1690 = vdwg.mxu0
    %1691 = vmatpush.bf16.msra.mxu0 %v868
    %1692 = vmatpush.bf16.msra.mxu0 %v866
    %1693 = vmatpush.bf16.msra.mxu0 %v864
    %1694 = vmatpush.bf16.msra.mxu0 %v862
    %1695 = vmatpush.bf16.msra.mxu0 %v860
    %1696 = vmatpush.bf16.msra.mxu0 %v858
    %1697 = vmatpush.bf16.msra.mxu0 %v856
    %1698 = vmatpush.bf16.msra.mxu0 %v854
    %1699 = vmatmul.bf16.gmra.mxu0 %v458
    %v1700 = vpop.f32.mrf.mxu0
    %v1701 = vadd.f32 %v1642, %v1700
    %v1702 = vpop.f32.mrf.mxu0
    %v1703 = vadd.f32 %v1644, %v1702
    %1704 = vmatmul.bf16.gmra.mxu0 %v466
    %v1705 = vpop.f32.mrf.mxu0
    %v1706 = vadd.f32 %v1647, %v1705
    %v1707 = vpop.f32.mrf.mxu0
    %v1708 = vadd.f32 %v1649, %v1707
    %1709 = vmatmul.bf16.gmra.mxu0 %v474
    %v1710 = vpop.f32.mrf.mxu0
    %v1711 = vadd.f32 %v1652, %v1710
    %v1712 = vpop.f32.mrf.mxu0
    %v1713 = vadd.f32 %v1654, %v1712
    %1714 = vmatmul.bf16.gmra.mxu0 %v482
    %v1715 = vpop.f32.mrf.mxu0
    %v1716 = vadd.f32 %v1657, %v1715
    %v1717 = vpop.f32.mrf.mxu0
    %v1718 = vadd.f32 %v1659, %v1717
    %1719 = vmatmul.bf16.gmra.mxu0 %v490
    %v1720 = vpop.f32.mrf.mxu0
    %v1721 = vadd.f32 %v1662, %v1720
    %v1722 = vpop.f32.mrf.mxu0
    %v1723 = vadd.f32 %v1664, %v1722
    %1724 = vmatmul.bf16.gmra.mxu0 %v498
    %v1725 = vpop.f32.mrf.mxu0
    %v1726 = vadd.f32 %v1667, %v1725
    %v1727 = vpop.f32.mrf.mxu0
    %v1728 = vadd.f32 %v1669, %v1727
    %1729 = vmatmul.bf16.gmra.mxu0 %v506
    %v1730 = vpop.f32.mrf.mxu0
    %v1731 = vadd.f32 %v1672, %v1730
    %v1732 = vpop.f32.mrf.mxu0
    %v1733 = vadd.f32 %v1674, %v1732
    %1734 = vmatmul.bf16.gmra.mxu0 %v514
    %v1735 = vpop.f32.mrf.mxu0
    %v1736 = vadd.f32 %v1677, %v1735
    %v1737 = vpop.f32.mrf.mxu0
    %v1738 = vadd.f32 %v1679, %v1737
    %1739 = vmatmul.bf16.gmra.mxu0 %v522
    %v1740 = vpop.f32.mrf.mxu0
    %v1741 = vadd.f32 %v1682, %v1740
    %v1742 = vpop.f32.mrf.mxu0
    %v1743 = vadd.f32 %v1684, %v1742
    %1744 = vmatmul.bf16.gmra.mxu0 %v530
    %v1745 = vpop.f32.mrf.mxu0
    %v1746 = vadd.f32 %v1687, %v1745
    %v1747 = vpop.f32.mrf.mxu0
    %v1748 = vadd.f32 %v1689, %v1747
    %1749 = vdwg.mxu0
    %1750 = vmatpush.bf16.msra.mxu0 %v884
    %1751 = vmatpush.bf16.msra.mxu0 %v882
    %1752 = vmatpush.bf16.msra.mxu0 %v880
    %1753 = vmatpush.bf16.msra.mxu0 %v878
    %1754 = vmatpush.bf16.msra.mxu0 %v876
    %1755 = vmatpush.bf16.msra.mxu0 %v874
    %1756 = vmatpush.bf16.msra.mxu0 %v872
    %1757 = vmatpush.bf16.msra.mxu0 %v870
    %1758 = vmatmul.bf16.gmra.mxu0 %v459
    %v1759 = vpop.f32.mrf.mxu0
    %v1760 = vadd.f32 %v1701, %v1759
    %v1761 = vpop.f32.mrf.mxu0
    %v1762 = vadd.f32 %v1703, %v1761
    %1763 = vmatmul.bf16.gmra.mxu0 %v467
    %v1764 = vpop.f32.mrf.mxu0
    %v1765 = vadd.f32 %v1706, %v1764
    %v1766 = vpop.f32.mrf.mxu0
    %v1767 = vadd.f32 %v1708, %v1766
    %1768 = vmatmul.bf16.gmra.mxu0 %v475
    %v1769 = vpop.f32.mrf.mxu0
    %v1770 = vadd.f32 %v1711, %v1769
    %v1771 = vpop.f32.mrf.mxu0
    %v1772 = vadd.f32 %v1713, %v1771
    %1773 = vmatmul.bf16.gmra.mxu0 %v483
    %v1774 = vpop.f32.mrf.mxu0
    %v1775 = vadd.f32 %v1716, %v1774
    %v1776 = vpop.f32.mrf.mxu0
    %v1777 = vadd.f32 %v1718, %v1776
    %1778 = vmatmul.bf16.gmra.mxu0 %v491
    %v1779 = vpop.f32.mrf.mxu0
    %v1780 = vadd.f32 %v1721, %v1779
    %v1781 = vpop.f32.mrf.mxu0
    %v1782 = vadd.f32 %v1723, %v1781
    %1783 = vmatmul.bf16.gmra.mxu0 %v499
    %v1784 = vpop.f32.mrf.mxu0
    %v1785 = vadd.f32 %v1726, %v1784
    %v1786 = vpop.f32.mrf.mxu0
    %v1787 = vadd.f32 %v1728, %v1786
    %1788 = vmatmul.bf16.gmra.mxu0 %v507
    %v1789 = vpop.f32.mrf.mxu0
    %v1790 = vadd.f32 %v1731, %v1789
    %v1791 = vpop.f32.mrf.mxu0
    %v1792 = vadd.f32 %v1733, %v1791
    %1793 = vmatmul.bf16.gmra.mxu0 %v515
    %v1794 = vpop.f32.mrf.mxu0
    %v1795 = vadd.f32 %v1736, %v1794
    %v1796 = vpop.f32.mrf.mxu0
    %v1797 = vadd.f32 %v1738, %v1796
    %1798 = vmatmul.bf16.gmra.mxu0 %v523
    %v1799 = vpop.f32.mrf.mxu0
    %v1800 = vadd.f32 %v1741, %v1799
    %v1801 = vpop.f32.mrf.mxu0
    %v1802 = vadd.f32 %v1743, %v1801
    %1803 = vmatmul.bf16.gmra.mxu0 %v531
    %v1804 = vpop.f32.mrf.mxu0
    %v1805 = vadd.f32 %v1746, %v1804
    %v1806 = vpop.f32.mrf.mxu0
    %v1807 = vadd.f32 %v1748, %v1806
    %1808 = vdwg.mxu0
    %1809 = vmatpush.bf16.msra.mxu0 0
    %1810 = vmatpush.bf16.msra.mxu0 0
    %1811 = vmatpush.bf16.msra.mxu0 0
    %1812 = vmatpush.bf16.msra.mxu0 0
    %1813 = vmatpush.bf16.msra.mxu0 %v892
    %1814 = vmatpush.bf16.msra.mxu0 %v890
    %1815 = vmatpush.bf16.msra.mxu0 %v888
    %1816 = vmatpush.bf16.msra.mxu0 %v886
    %1817 = vmatmul.bf16.gmra.mxu0 %v895
    %v1818 = vpop.f32.mrf.mxu0
    %v1819 = vadd.f32 %v1760, %v1818
    %v1820 = vpop.f32.mrf.mxu0
    %v1821 = vadd.f32 %v1762, %v1820
    %1822 = vmatmul.bf16.gmra.mxu0 %v898
    %v1823 = vpop.f32.mrf.mxu0
    %v1824 = vadd.f32 %v1765, %v1823
    %v1825 = vpop.f32.mrf.mxu0
    %v1826 = vadd.f32 %v1767, %v1825
    %1827 = vmatmul.bf16.gmra.mxu0 %v901
    %v1828 = vpop.f32.mrf.mxu0
    %v1829 = vadd.f32 %v1770, %v1828
    %v1830 = vpop.f32.mrf.mxu0
    %v1831 = vadd.f32 %v1772, %v1830
    %1832 = vmatmul.bf16.gmra.mxu0 %v904
    %v1833 = vpop.f32.mrf.mxu0
    %v1834 = vadd.f32 %v1775, %v1833
    %v1835 = vpop.f32.mrf.mxu0
    %v1836 = vadd.f32 %v1777, %v1835
    %1837 = vmatmul.bf16.gmra.mxu0 %v907
    %v1838 = vpop.f32.mrf.mxu0
    %v1839 = vadd.f32 %v1780, %v1838
    %v1840 = vpop.f32.mrf.mxu0
    %v1841 = vadd.f32 %v1782, %v1840
    %1842 = vmatmul.bf16.gmra.mxu0 %v910
    %v1843 = vpop.f32.mrf.mxu0
    %v1844 = vadd.f32 %v1785, %v1843
    %v1845 = vpop.f32.mrf.mxu0
    %v1846 = vadd.f32 %v1787, %v1845
    %1847 = vmatmul.bf16.gmra.mxu0 %v913
    %v1848 = vpop.f32.mrf.mxu0
    %v1849 = vadd.f32 %v1790, %v1848
    %v1850 = vpop.f32.mrf.mxu0
    %v1851 = vadd.f32 %v1792, %v1850
    %1852 = vmatmul.bf16.gmra.mxu0 %v916
    %v1853 = vpop.f32.mrf.mxu0
    %v1854 = vadd.f32 %v1795, %v1853
    %v1855 = vpop.f32.mrf.mxu0
    %v1856 = vadd.f32 %v1797, %v1855
    %1857 = vmatmul.bf16.gmra.mxu0 %v919
    %v1858 = vpop.f32.mrf.mxu0
    %v1859 = vadd.f32 %v1800, %v1858
    %v1860 = vpop.f32.mrf.mxu0
    %v1861 = vadd.f32 %v1802, %v1860
    %1862 = vmatmul.bf16.gmra.mxu0 %v922
    %v1863 = vpop.f32.mrf.mxu0
    %v1864 = vadd.f32 %v1805, %v1863
    %v1865 = vpop.f32.mrf.mxu0
    %v1866 = vadd.f32 %v1807, %v1865
    %1867 = vdwg.mxu0
    %1868 = vst [vmem:[#allocation2] sm:$0xff] %v1347
    %vm1869 = vcmask 556032
    %1870 = vst.msk [vmem:[#allocation2 + $0x8] sm:$0xff] %vm1869, %v1819
    %1871 = vst [vmem:[#allocation2 + $0x10] sm:$0xff] %v1349
    %1872 = vst.msk [vmem:[#allocation2 + $0x18] sm:$0xff] %vm1869, %v1821
    %1873 = vst [vmem:[#allocation2 + $0x20] sm:$0xff] %v1352
    %1874 = vst.msk [vmem:[#allocation2 + $0x28] sm:$0xff] %vm1869, %v1824
    %1875 = vst [vmem:[#allocation2 + $0x30] sm:$0xff] %v1354
    %1876 = vst.msk [vmem:[#allocation2 + $0x38] sm:$0xff] %vm1869, %v1826
    %1877 = vst [vmem:[#allocation2 + $0x40] sm:$0xff] %v1357
    %1878 = vst.msk [vmem:[#allocation2 + $0x48] sm:$0xff] %vm1869, %v1829
    %1879 = vst [vmem:[#allocation2 + $0x50] sm:$0xff] %v1359
    %1880 = vst.msk [vmem:[#allocation2 + $0x58] sm:$0xff] %vm1869, %v1831
    %1881 = vst [vmem:[#allocation2 + $0x60] sm:$0xff] %v1362
    %1882 = vst.msk [vmem:[#allocation2 + $0x68] sm:$0xff] %vm1869, %v1834
    %1883 = vst [vmem:[#allocation2 + $0x70] sm:$0xff] %v1364
    %1884 = vst.msk [vmem:[#allocation2 + $0x78] sm:$0xff] %vm1869, %v1836
    %1885 = vst [vmem:[#allocation2 + $0x80] sm:$0xff] %v1367
    %1886 = vst.msk [vmem:[#allocation2 + $0x88] sm:$0xff] %vm1869, %v1839
    %1887 = vst [vmem:[#allocation2 + $0x90] sm:$0xff] %v1369
    %1888 = vst.msk [vmem:[#allocation2 + $0x98] sm:$0xff] %vm1869, %v1841
    %1889 = vst [vmem:[#allocation2 + $0xa0] sm:$0xff] %v1372
    %1890 = vst.msk [vmem:[#allocation2 + $0xa8] sm:$0xff] %vm1869, %v1844
    %1891 = vst [vmem:[#allocation2 + $0xb0] sm:$0xff] %v1374
    %1892 = vst.msk [vmem:[#allocation2 + $0xb8] sm:$0xff] %vm1869, %v1846
    %1893 = vst [vmem:[#allocation2 + $0xc0] sm:$0xff] %v1377
    %1894 = vst.msk [vmem:[#allocation2 + $0xc8] sm:$0xff] %vm1869, %v1849
    %1895 = vst [vmem:[#allocation2 + $0xd0] sm:$0xff] %v1379
    %1896 = vst.msk [vmem:[#allocation2 + $0xd8] sm:$0xff] %vm1869, %v1851
    %1897 = vst [vmem:[#allocation2 + $0xe0] sm:$0xff] %v1382
    %1898 = vst.msk [vmem:[#allocation2 + $0xe8] sm:$0xff] %vm1869, %v1854
    %1899 = vst [vmem:[#allocation2 + $0xf0] sm:$0xff] %v1384
    %1900 = vst.msk [vmem:[#allocation2 + $0xf8] sm:$0xff] %vm1869, %v1856
    %1901 = vst [vmem:[#allocation2 + $0x100] sm:$0xff] %v1387
    %1902 = vst.msk [vmem:[#allocation2 + $0x108] sm:$0xff] %vm1869, %v1859
    %1903 = vst [vmem:[#allocation2 + $0x110] sm:$0xff] %v1389
    %1904 = vst.msk [vmem:[#allocation2 + $0x118] sm:$0xff] %vm1869, %v1861
    %1905 = vst [vmem:[#allocation2 + $0x120] sm:$0xff] %v1392
    %1906 = vst.msk [vmem:[#allocation2 + $0x128] sm:$0xff] %vm1869, %v1864
    %1907 = vst [vmem:[#allocation2 + $0x130] sm:$0xff] %v1394
    %1908 = vst.msk [vmem:[#allocation2 + $0x138] sm:$0xff] %vm1869, %v1866
    // Predicated region
    $region14: #{tpu_custom_call.1} parent=1 // pred_check
      _
    $region15: #{tpu_custom_call.1} parent=1 // pred_check_branch
      %1910 = sbr.rel (0) target = $region17
    $region16: #{tpu_custom_call.1} parent=1 // pred_region
      %1912 = vsyncadd [#allocation3], 0
      %s1913 = sshll.u32 [#allocation2], 4
      %s1914 = int_to_ptr.vmem [resolvable:$true] %s1913
      %s1915 = sshll.u32 %s3, 4
      %s1916 = int_to_ptr.hbm [resolvable:$true] %s1915
      %1921 = dma.vmem_to_hbm [thread:$0]  %s1914, 5120, %s1916, [#allocation3], 256, 256, 16
    $region17: #{tpu_custom_call.1} parent=1 // pred_fallthru
      _
    // Predicated region
    $region18: #{tpu_custom_call.1} parent=1 // pred_check
      _
    $region19: #{tpu_custom_call.1} parent=1 // pred_check_branch
      %1923 = sbr.rel (0) target = $region21
    $region20: #{tpu_custom_call.1} parent=1 // pred_region
      %1925 = dma.done [#allocation3], 5120
    $region21: #{tpu_custom_call.1} parent=1 // pred_fallthru
      _
    %1926 = vsyncpa [#allocation3], 1

</llo_original>
